<compile_context>
chip_gen: v5e
topology: v5e:2x2
jax: 0.10.0
libtpu: 0.0.40
codegen_flags: <defaults>
</compile_context>

<pallas_src>
import functools

import jax
import jax.numpy as jnp
from jax.experimental import pallas as pl
from jax.experimental.pallas import tpu as pltpu

_LANE = 128
_NEG_INF = -1e30


def _round_up(x, m):
    return (x + m - 1) // m * m


def _gat_attention_tile(adj_tile, z_ref, ssrc_ref, adst_ref, row0, tm, heads, hid):
    """GATConv aggregation for one tile of target nodes.

    adj_tile: [tm, n_pad]    bf16 adjacency rows (adj[i, j] != 0 <=> edge j -> i)
    z_ref:    [n_pad, pw]    bf16 scratch: x @ W for every node (head-major cols)
    ssrc_ref: [s_sub, n_pad] f32 scratch: row h = <z_j^h, att_src^h> (hoisted)
    adst_ref: [s_sub, pw]    bf16: row h = att_dst^h at cols [h*hid, (h+1)*hid)
    returns:  [tm, pw] f32; head h output occupies columns [h*hid, (h+1)*hid)
    """
    n_pad, pw = z_ref.shape

    # Edge mask incl. self loops (GATConv add_self_loops=True), built in-kernel
    # so adjacency stays in its compact dtype and no eye() pass is needed.
    col = jax.lax.broadcasted_iota(jnp.int32, (tm, n_pad), 1)
    row = jax.lax.broadcasted_iota(jnp.int32, (tm, n_pad), 0) + row0
    mask = jnp.logical_or(adj_tile != 0, col == row)

    z_all = z_ref[...]                                   # [n_pad, pw] bf16
    z_tile = z_ref[pl.ds(row0, tm), :]                   # [tm, pw]   bf16
    # Destination scores for all heads at once: [tm, s_sub].
    s_dst = jax.lax.dot_general(z_tile, adst_ref[...], (((1,), (1,)), ((), ())),
                                preferred_element_type=jnp.float32)
    lane = jax.lax.broadcasted_iota(jnp.int32, (1, pw), 1)

    out = jnp.zeros((tm, pw), jnp.float32)
    for h in range(heads):
        lo = h * hid
        e = s_dst[:, h:h + 1] + ssrc_ref[h:h + 1, :]     # [tm, n_pad]
        e = jnp.where(e >= 0.0, e, 0.2 * e)              # LeakyReLU(0.2)
        e = jnp.where(mask, e, _NEG_INF)
        e = e - jnp.max(e, axis=-1, keepdims=True)
        w = jnp.exp(e)                   # masked entries underflow to exactly 0
        inv = pl.reciprocal(jnp.sum(w, axis=-1, keepdims=True), approx=True)
        agg = jnp.dot(w.astype(z_all.dtype), z_all,
                      preferred_element_type=jnp.float32)    # [tm, pw]
        head_cols = jnp.where(
            jnp.logical_and(lane >= lo, lane < lo + hid), 1.0, 0.0)
        out = out + agg * (inv * head_cols)   # output-side mask + normalisation
    return out


def _gat2_kernel(adj_ref, x_ref, w1_ref, a1s_ref, a1d_ref, w2_ref, a2s_ref,
                 a2d_ref, o_ref, z1_ref, s1_ref, z2_ref, s2_ref, *,
                 heads, hid1, hid2):
    p = pl.program_id(0)    # phase: 0 = x@W1, 1 = attn1 + h@W2, 2 = attn2
    t = pl.program_id(1)    # target-node tile
    tm = o_ref.shape[0]
    row0 = pl.multiple_of(t * tm, tm)

    @pl.when(p == 0)
    def _project_layer1():
        z = jnp.dot(x_ref[...], w1_ref[...], preferred_element_type=jnp.float32)
        z1_ref[pl.ds(row0, tm), :] = z.astype(z1_ref.dtype)

    @pl.when(jnp.logical_and(p == 1, t == 0))
    def _hoist_src_scores_layer1():
        # Tile-invariant source scores, computed ONCE per layer for the whole
        # graph from the resident z1 scratch (head layout is baked into a1s).
        s1_ref[...] = jax.lax.dot_general(
            a1s_ref[...], z1_ref[...], (((1,), (1,)), ((), ())),
            preferred_element_type=jnp.float32)

    @pl.when(p == 1)
    def _attend_layer1_project_layer2():
        h = _gat_attention_tile(adj_ref[...], z1_ref, s1_ref, a1d_ref,
                                row0, tm, heads, hid1)
        h = jnp.maximum(h, 0.0)          # ReLU; dropout = identity in eval mode
        z = jnp.dot(h.astype(w2_ref.dtype), w2_ref[...],
                    preferred_element_type=jnp.float32)
        z2_ref[pl.ds(row0, tm), :] = z.astype(z2_ref.dtype)

    @pl.when(jnp.logical_and(p == 2, t == 0))
    def _hoist_src_scores_layer2():
        s2_ref[...] = jax.lax.dot_general(
            a2s_ref[...], z2_ref[...], (((1,), (1,)), ((), ())),
            preferred_element_type=jnp.float32)

    @pl.when(p == 2)
    def _attend_layer2():
        o_ref[...] = _gat_attention_tile(adj_ref[...], z2_ref, s2_ref, a2d_ref,
                                         row0, tm, heads, hid2)


def _head_layout(a, s_sub, width, dtype):
    """[heads, hid] -> [s_sub, width]; head h placed at cols [h*hid, (h+1)*hid)."""
    heads, hid = a.shape
    m = jnp.zeros((s_sub, width), jnp.float32)
    for h in range(heads):
        m = m.at[h, h * hid:(h + 1) * hid].set(a[h].astype(jnp.float32))
    return m.astype(dtype)


def gat_forward(x, adj, params, *, heads):
    """Fused 2-layer GAT.  adj: dense [N, N], adj[i, j] != 0 <=> edge j -> i."""
    n, cin = x.shape
    (w1, a1_src, a1_dst), (w2, a2_src, a2_dst) = params
    d1 = w1.shape[1]            # heads * hidden
    d2 = w2.shape[1]            # heads * out
    assert w2.shape[0] == d1
    hid1, hid2 = d1 // heads, d2 // heads

    cin_p = _round_up(cin, _LANE)
    p1 = _round_up(d1, _LANE)
    p2 = _round_up(d2, _LANE)
    s_sub = _round_up(heads, 8)

    # Node tile: one tile for small graphs (minimises ~0.35us grid-step
    # overhead), 128-row tiles otherwise.
    # TODO(synk): tm=256 on v6e and a neighbour-axis online-softmax grid axis
    # for v7x's 64 MiB VMEM once the full-graph z scratch no longer fits.
    tm = _round_up(n, 16) if n <= 256 else 128
    n_pad = _round_up(n, tm)
    nt = n_pad // tm

    f32, bf16 = jnp.float32, jnp.bfloat16
    # Adjacency as a compact bf16 0/1 mask (only `!= 0` is used in-kernel);
    # self loops are added inside the kernel, not materialised here.
    adj_p = jnp.zeros((n_pad, n_pad), bf16).at[:n, :n].set((adj != 0).astype(bf16))
    x_p = jnp.zeros((n_pad, cin_p), bf16).at[:n, :cin].set(x.astype(bf16))
    w1_p = jnp.zeros((cin_p, p1), bf16).at[:cin, :d1].set(w1.astype(bf16))
    w2_p = jnp.zeros((p1, p2), bf16).at[:d1, :d2].set(w2.astype(bf16))
    a1s_p = _head_layout(a1_src, s_sub, p1, bf16)
    a1d_p = _head_layout(a1_dst, s_sub, p1, bf16)
    a2s_p = _head_layout(a2_src, s_sub, p2, bf16)
    a2d_p = _head_layout(a2_dst, s_sub, p2, bf16)

    # Explicit scoped-VMEM budget (v5e's default is only 16 MiB).
    est = (2 * n_pad * (p1 + p2)                     # z1 + z2 (bf16)
           + 2 * 4 * s_sub * n_pad                   # s1 + s2 (f32)
           + 3 * 2 * tm * (n_pad + cin_p)            # adj + x blocks (bf16)
           + 3 * 4 * tm * p2                         # out blocks (f32)
           + 2 * (cin_p * p1 + p1 * p2 + 4 * s_sub * max(p1, p2)))
    vmem_limit = int(min(100 * 2 ** 20, max(32 * 2 ** 20, 2 * est)))

    kernel = functools.partial(_gat2_kernel, heads=heads, hid1=hid1, hid2=hid2)
    out_p = pl.pallas_call(
        kernel,
        out_shape=jax.ShapeDtypeStruct((n_pad, p2), f32),
        grid=(3, nt),
        in_specs=[
            # Phase-aware maps: adj only read in phases 1/2, x only in phase 0
            # -> 2 adjacency passes and a single x pass over the whole grid.
            pl.BlockSpec((tm, n_pad), lambda p, t: (jnp.where(p > 0, t, 0), 0)),
            pl.BlockSpec((tm, cin_p), lambda p, t: (jnp.where(p == 0, t, 0), 0)),
            pl.BlockSpec((cin_p, p1), lambda p, t: (0, 0)),     # W1
            pl.BlockSpec((s_sub, p1), lambda p, t: (0, 0)),     # att1_src
            pl.BlockSpec((s_sub, p1), lambda p, t: (0, 0)),     # att1_dst
            pl.BlockSpec((p1, p2), lambda p, t: (0, 0)),        # W2
            pl.BlockSpec((s_sub, p2), lambda p, t: (0, 0)),     # att2_src
            pl.BlockSpec((s_sub, p2), lambda p, t: (0, 0)),     # att2_dst
        ],
        # Output only written in phase 2; block index is pinned before that so
        # every output block is written back exactly once with phase-2 data.
        out_specs=pl.BlockSpec((tm, p2),
                               lambda p, t: (jnp.where(p == 2, t, 0), 0)),
        scratch_shapes=[
            pltpu.VMEM((n_pad, p1), bf16),      # z1 = x @ W1, all nodes
            pltpu.VMEM((s_sub, n_pad), f32),    # hoisted layer-1 source scores
            pltpu.VMEM((n_pad, p2), bf16),      # z2 = relu(attn1) @ W2, all nodes
            pltpu.VMEM((s_sub, n_pad), f32),    # hoisted layer-2 source scores
        ],
        # Phases must run in order and later phases read every tile's scratch
        # rows -> both grid axes are sequential.
        compiler_params=pltpu.CompilerParams(
            dimension_semantics=("arbitrary", "arbitrary"),
            vmem_limit_bytes=vmem_limit),
    )(adj_p, x_p, w1_p, a1s_p, a1d_p, w2_p, a2s_p, a2d_p)
    return out_p[:n, :d2]


# ----------------------------- pure-JAX reference ---------------------------
def _gat_conv_ref(x, adj, w, a_src, a_dst, heads):
    n = x.shape[0]
    cout = w.shape[1] // heads
    hp = jax.lax.Precision.HIGHEST
    z = jnp.dot(x, w, precision=hp).reshape(n, heads, cout)
    s_src = jnp.einsum("nhc,hc->nh", z, a_src, precision=hp)
    s_dst = jnp.einsum("nhc,hc->nh", z, a_dst, precision=hp)
    e = s_dst[:, None, :] + s_src[None, :, :]            # e[i, j, h]
    e = jnp.where(e >= 0.0, e, 0.2 * e)
    mask = (adj != 0.0)[:, :, None]
    e = jnp.where(mask, e, _NEG_INF)
    e = e - jnp.max(e, axis=1, keepdims=True)
    w_att = jnp.where(mask, jnp.exp(e), 0.0)
    alpha = w_att / jnp.maximum(jnp.sum(w_att, axis=1, keepdims=True), 1e-20)
    out = jnp.einsum("ijh,jhc->ihc", alpha, z, precision=hp)
    return out.reshape(n, heads * cout)


def gat_ref(x, adj, params, heads):
    adj = jnp.maximum((adj != 0).astype(jnp.float32),
                      jnp.eye(adj.shape[0], dtype=jnp.float32))
    (w1, a1s, a1d), (w2, a2s, a2d) = params
    h = jnp.maximum(_gat_conv_ref(x, adj, w1, a1s, a1d, heads), 0.0)
    return _gat_conv_ref(h, adj, w2, a2s, a2d, heads)


def init_params(key, in_channels, hidden_channels, out_channels, heads):
    """Deterministic synthetic parameters matching GATConv (bias=False) shapes."""
    def layer(k, cin, cout):
        k1, k2, k3 = jax.random.split(k, 3)
        w = jax.random.normal(k1, (cin, heads * cout), jnp.float32) / jnp.sqrt(
            jnp.float32(cin))                              # lin.weight^T
        a_src = jax.random.normal(k2, (heads, cout), jnp.float32) / jnp.sqrt(
            jnp.float32(cout))                             # att_src
        a_dst = jax.random.normal(k3, (heads, cout), jnp.float32) / jnp.sqrt(
            jnp.float32(cout))                             # att_dst
        return (w, a_src, a_dst)

    k1, k2 = jax.random.split(key)
    return [layer(k1, in_channels, hidden_channels),
            layer(k2, heads * hidden_channels, out_channels)]


if __name__ == "__main__":
    key = jax.random.PRNGKey(0)
    n_nodes, in_channels, hidden_channels, out_channels, num_heads = 16, 8, 32, 4, 2

    key, kx, ka, kp = jax.random.split(key, 4)
    x = jax.random.normal(kx, (n_nodes, in_channels), jnp.float32)
    adj = (jax.random.uniform(ka, (n_nodes, n_nodes)) < 0.25).astype(jnp.float32)

    params = init_params(kp, in_channels, hidden_channels, out_channels, num_heads)

    out = gat_forward(x, adj, params, heads=num_heads)
    jax.block_until_ready(out)
    assert out.shape == (n_nodes, num_heads * out_channels)

    ref = gat_ref(x, adj, params, num_heads)
    # Mixed abs/rel tolerance: the kernel runs its matmuls in bf16 (f32 accum).
    err = float(jnp.max(jnp.abs(out - ref) / (1.0 + jnp.abs(ref))))
    assert err < 5e-2, f"kernel/reference mismatch, max mixed err = {err}"
    print("KERNEL_OK")
</pallas_src>

<mosaic_0001>
module attributes {stable_mosaic.version = 11 : i64} {
  func.func @_gat2_kernel(%arg0: i32, %arg1: i32, %arg2: memref<16x16xbf16, #tpu.memory_space<vmem>>, %arg3: memref<16x128xbf16, #tpu.memory_space<vmem>>, %arg4: memref<128x128xbf16, #tpu.memory_space<vmem>>, %arg5: memref<8x128xbf16, #tpu.memory_space<vmem>>, %arg6: memref<8x128xbf16, #tpu.memory_space<vmem>>, %arg7: memref<128x128xbf16, #tpu.memory_space<vmem>>, %arg8: memref<8x128xbf16, #tpu.memory_space<vmem>>, %arg9: memref<8x128xbf16, #tpu.memory_space<vmem>>, %arg10: memref<16x128xf32, #tpu.memory_space<vmem>>, %arg11: memref<16x128xbf16, #tpu.memory_space<vmem>>, %arg12: memref<8x16xf32, #tpu.memory_space<vmem>>, %arg13: memref<16x128xbf16, #tpu.memory_space<vmem>>, %arg14: memref<8x16xf32, #tpu.memory_space<vmem>>) attributes {dimension_semantics = [#tpu.dimension_semantics<arbitrary>, #tpu.dimension_semantics<arbitrary>], iteration_bounds = array<i64: 3, 1>, scalar_prefetch = 0 : i64, scratch_operands = 4 : i64, tpu.core_type = #tpu.core_type<tc>, window_params = [{transform_indices = @transform_0, window_bounds = array<i64: 16, 16>}, {transform_indices = @transform_1, window_bounds = array<i64: 16, 128>}, {pipeline_mode = #tpu.pipeline_mode<synchronous>, transform_indices = @transform_2, window_bounds = array<i64: 128, 128>}, {pipeline_mode = #tpu.pipeline_mode<synchronous>, transform_indices = @transform_3, window_bounds = array<i64: 8, 128>}, {pipeline_mode = #tpu.pipeline_mode<synchronous>, transform_indices = @transform_4, window_bounds = array<i64: 8, 128>}, {pipeline_mode = #tpu.pipeline_mode<synchronous>, transform_indices = @transform_5, window_bounds = array<i64: 128, 128>}, {pipeline_mode = #tpu.pipeline_mode<synchronous>, transform_indices = @transform_6, window_bounds = array<i64: 8, 128>}, {pipeline_mode = #tpu.pipeline_mode<synchronous>, transform_indices = @transform_7, window_bounds = array<i64: 8, 128>}, {transform_indices = @transform_8, window_bounds = array<i64: 16, 128>}]} {
    %c16_i32 = arith.constant 16 : i32
    %0 = arith.muli %arg1, %c16_i32 : i32
    %1 = tpu.assume_multiple %0, 16 : i32
    %c0_i32 = arith.constant 0 : i32
    %2 = arith.cmpi eq, %arg0, %c0_i32 : i32
    %3 = arith.extui %2 : i1 to i32
    %c0_i32_0 = arith.constant 0 : i32
    %4 = arith.cmpi ne, %3, %c0_i32_0 : i32
    scf.if %4 {
      %c0 = arith.constant 0 : index
      %c0_9 = arith.constant 0 : index
      %21 = vector.load %arg3[%c0, %c0_9] : memref<16x128xbf16, #tpu.memory_space<vmem>>, vector<16x128xbf16>
      %c0_10 = arith.constant 0 : index
      %c0_11 = arith.constant 0 : index
      %22 = vector.load %arg4[%c0_10, %c0_11] : memref<128x128xbf16, #tpu.memory_space<vmem>>, vector<128x128xbf16>
      %cst = arith.constant dense<0.000000e+00> : vector<16x128xf32>
      %23 = tpu.matmul %21, %22, %cst {dimension_numbers = #tpu.dot_dimension_numbers<[1], [0], [0], [1], [0, 0, 1, 1], [], []>} : vector<16x128xbf16>, vector<128x128xbf16>, vector<16x128xf32> -> vector<16x128xf32>
      %24 = arith.truncf %23 : vector<16x128xf32> to vector<16x128xbf16>
      %25 = arith.index_cast %1 : i32 to index
      %c0_12 = arith.constant 0 : index
      %26 = vector.load %arg11[%25, %c0_12] : memref<16x128xbf16, #tpu.memory_space<vmem>>, vector<16x128xbf16>
      tpu.vector_store %arg11[%25, %c0_12], %24 {strides = array<i32>} : memref<16x128xbf16, #tpu.memory_space<vmem>>, vector<16x128xbf16>,
    } else {
    }
    %c1_i32 = arith.constant 1 : i32
    %5 = arith.cmpi eq, %arg0, %c1_i32 : i32
    %c0_i32_1 = arith.constant 0 : i32
    %6 = arith.cmpi eq, %arg1, %c0_i32_1 : i32
    %7 = arith.andi %5, %6 : i1
    %8 = arith.extui %7 : i1 to i32
    %c0_i32_2 = arith.constant 0 : i32
    %9 = arith.cmpi ne, %8, %c0_i32_2 : i32
    scf.if %9 {
      %c0 = arith.constant 0 : index
      %c0_9 = arith.constant 0 : index
      %21 = vector.load %arg5[%c0, %c0_9] : memref<8x128xbf16, #tpu.memory_space<vmem>>, vector<8x128xbf16>
      %c0_10 = arith.constant 0 : index
      %c0_11 = arith.constant 0 : index
      %22 = vector.load %arg11[%c0_10, %c0_11] : memref<16x128xbf16, #tpu.memory_space<vmem>>, vector<16x128xbf16>
      %cst = arith.constant dense<0.000000e+00> : vector<8x16xf32>
      %23 = tpu.matmul %21, %22, %cst {dimension_numbers = #tpu.dot_dimension_numbers<[1], [1], [0], [0], [0, 0, 1, 0], [], []>} : vector<8x128xbf16>, vector<16x128xbf16>, vector<8x16xf32> -> vector<8x16xf32>
      %c0_12 = arith.constant 0 : index
      %c0_13 = arith.constant 0 : index
      %24 = vector.load %arg12[%c0_12, %c0_13] : memref<8x16xf32, #tpu.memory_space<vmem>>, vector<8x16xf32>
      tpu.vector_store %arg12[%c0_12, %c0_13], %23 {strides = array<i32>} : memref<8x16xf32, #tpu.memory_space<vmem>>, vector<8x16xf32>,
    } else {
    }
    %c1_i32_3 = arith.constant 1 : i32
    %10 = arith.cmpi eq, %arg0, %c1_i32_3 : i32
    %11 = arith.extui %10 : i1 to i32
    %c0_i32_4 = arith.constant 0 : i32
    %12 = arith.cmpi ne, %11, %c0_i32_4 : i32
    scf.if %12 {
      %c0 = arith.constant 0 : index
      %c0_9 = arith.constant 0 : index
      %21 = vector.load %arg2[%c0, %c0_9] : memref<16x16xbf16, #tpu.memory_space<vmem>>, vector<16x16xbf16>
      %22 = tpu.iota {dimensions = array<i32: 1>} : vector<16x16xi32>
      %23 = tpu.iota {dimensions = array<i32: 0>} : vector<16x16xi32>
      %24 = vector.broadcast %1 : i32 to vector<16x16xi32>
      %25 = arith.addi %23, %24 : vector<16x16xi32>
      %cst = arith.constant 0.000000e+00 : bf16
      %26 = vector.broadcast %cst : bf16 to vector<16x16xbf16>
      %27 = arith.cmpf one, %21, %26 : vector<16x16xbf16>
      %28 = arith.cmpi eq, %22, %25 : vector<16x16xi32>
      %29 = arith.ori %27, %28 : vector<16x16xi1>
      %c0_10 = arith.constant 0 : index
      %c0_11 = arith.constant 0 : index
      %30 = vector.load %arg11[%c0_10, %c0_11] : memref<16x128xbf16, #tpu.memory_space<vmem>>, vector<16x128xbf16>
      %31 = arith.index_cast %1 : i32 to index
      %c0_12 = arith.constant 0 : index
      %32 = vector.load %arg11[%31, %c0_12] : memref<16x128xbf16, #tpu.memory_space<vmem>>, vector<16x128xbf16>
      %c0_13 = arith.constant 0 : index
      %c0_14 = arith.constant 0 : index
      %33 = vector.load %arg6[%c0_13, %c0_14] : memref<8x128xbf16, #tpu.memory_space<vmem>>, vector<8x128xbf16>
      %cst_15 = arith.constant dense<0.000000e+00> : vector<16x8xf32>
      %34 = tpu.matmul %32, %33, %cst_15 {dimension_numbers = #tpu.dot_dimension_numbers<[1], [1], [0], [0], [0, 0, 1, 0], [], []>} : vector<16x128xbf16>, vector<8x128xbf16>, vector<16x8xf32> -> vector<16x8xf32>
      %35 = tpu.iota {dimensions = array<i32: 1>} : vector<1x128xi32>
      %cst_16 = arith.constant 0.000000e+00 : f32
      %36 = vector.broadcast %cst_16 : f32 to vector<16x128xf32>
      %37 = vector.extract_strided_slice %34 {offsets = [0, 0], sizes = [16, 1], strides = [1, 1]} : vector<16x8xf32> to vector<16x1xf32>
      %c0_17 = arith.constant 0 : index
      %c0_18 = arith.constant 0 : index
      %38 = vector.load %arg12[%c0_17, %c0_18] : memref<8x16xf32, #tpu.memory_space<vmem>>, vector<1x16xf32>
      %39 = vector.broadcast %37 : vector<16x1xf32> to vector<16x16xf32>
      %40 = vector.broadcast %38 : vector<1x16xf32> to vector<16x16xf32>
      %41 = arith.addf %39, %40 : vector<16x16xf32>
      %cst_19 = arith.constant 0.000000e+00 : f32
      %42 = vector.broadcast %cst_19 : f32 to vector<16x16xf32>
      %43 = arith.cmpf oge, %41, %42 : vector<16x16xf32>
      %cst_20 = arith.constant 2.000000e-01 : f32
      %44 = vector.broadcast %cst_20 : f32 to vector<16x16xf32>
      %45 = arith.mulf %44, %41 : vector<16x16xf32>
      %46 = arith.select %43, %41, %45 : vector<16x16xi1>, vector<16x16xf32>
      %cst_21 = arith.constant -1.000000e+30 : f32
      %47 = vector.broadcast %cst_21 : f32 to vector<16x16xf32>
      %48 = arith.select %29, %46, %47 : vector<16x16xi1>, vector<16x16xf32>
      %cst_22 = arith.constant dense<0xFF800000> : vector<16xf32>
      %49 = vector.multi_reduction <maximumf>, %48, %cst_22 [1] : vector<16x16xf32> to vector<16xf32>
      %50 = vector.shape_cast %49 : vector<16xf32> to vector<16x1xf32>
      %51 = vector.broadcast %50 : vector<16x1xf32> to vector<16x16xf32>
      %52 = arith.subf %48, %51 : vector<16x16xf32>
      %53 = math.exp %52 : vector<16x16xf32>
      %cst_23 = arith.constant dense<0.000000e+00> : vector<16xf32>
      %54 = vector.multi_reduction <add>, %53, %cst_23 [1] : vector<16x16xf32> to vector<16xf32>
      %55 = vector.shape_cast %54 : vector<16xf32> to vector<16x1xf32>
      %56 = tpu.reciprocal %55 {approx = true} : vector<16x1xf32> -> vector<16x1xf32>
      %57 = arith.truncf %53 : vector<16x16xf32> to vector<16x16xbf16>
      %cst_24 = arith.constant dense<0.000000e+00> : vector<16x128xf32>
      %58 = tpu.matmul %57, %30, %cst_24 {dimension_numbers = #tpu.dot_dimension_numbers<[1], [0], [0], [1], [0, 0, 1, 1], [], []>} : vector<16x16xbf16>, vector<16x128xbf16>, vector<16x128xf32> -> vector<16x128xf32>
      %c0_i32_25 = arith.constant 0 : i32
      %59 = vector.broadcast %c0_i32_25 : i32 to vector<1x128xi32>
      %60 = arith.cmpi sge, %35, %59 : vector<1x128xi32>
      %c32_i32 = arith.constant 32 : i32
      %61 = vector.broadcast %c32_i32 : i32 to vector<1x128xi32>
      %62 = arith.cmpi slt, %35, %61 : vector<1x128xi32>
      %63 = arith.andi %60, %62 : vector<1x128xi1>
      %cst_26 = arith.constant 1.000000e+00 : f32
      %cst_27 = arith.constant 0.000000e+00 : f32
      %64 = vector.broadcast %cst_26 : f32 to vector<1x128xf32>
      %65 = vector.broadcast %cst_27 : f32 to vector<1x128xf32>
      %66 = arith.select %63, %64, %65 : vector<1x128xi1>, vector<1x128xf32>
      %67 = vector.broadcast %56 : vector<16x1xf32> to vector<16x128xf32>
      %68 = vector.broadcast %66 : vector<1x128xf32> to vector<16x128xf32>
      %69 = arith.mulf %67, %68 : vector<16x128xf32>
      %70 = arith.mulf %58, %69 : vector<16x128xf32>
      %71 = arith.addf %36, %70 : vector<16x128xf32>
      %72 = vector.extract_strided_slice %34 {offsets = [0, 1], sizes = [16, 1], strides = [1, 1]} : vector<16x8xf32> to vector<16x1xf32>
      %c1 = arith.constant 1 : index
      %c0_28 = arith.constant 0 : index
      %73 = vector.load %arg12[%c1, %c0_28] : memref<8x16xf32, #tpu.memory_space<vmem>>, vector<1x16xf32>
      %74 = vector.broadcast %72 : vector<16x1xf32> to vector<16x16xf32>
      %75 = vector.broadcast %73 : vector<1x16xf32> to vector<16x16xf32>
      %76 = arith.addf %74, %75 : vector<16x16xf32>
      %cst_29 = arith.constant 0.000000e+00 : f32
      %77 = vector.broadcast %cst_29 : f32 to vector<16x16xf32>
      %78 = arith.cmpf oge, %76, %77 : vector<16x16xf32>
      %cst_30 = arith.constant 2.000000e-01 : f32
      %79 = vector.broadcast %cst_30 : f32 to vector<16x16xf32>
      %80 = arith.mulf %79, %76 : vector<16x16xf32>
      %81 = arith.select %78, %76, %80 : vector<16x16xi1>, vector<16x16xf32>
      %cst_31 = arith.constant -1.000000e+30 : f32
      %82 = vector.broadcast %cst_31 : f32 to vector<16x16xf32>
      %83 = arith.select %29, %81, %82 : vector<16x16xi1>, vector<16x16xf32>
      %cst_32 = arith.constant dense<0xFF800000> : vector<16xf32>
      %84 = vector.multi_reduction <maximumf>, %83, %cst_32 [1] : vector<16x16xf32> to vector<16xf32>
      %85 = vector.shape_cast %84 : vector<16xf32> to vector<16x1xf32>
      %86 = vector.broadcast %85 : vector<16x1xf32> to vector<16x16xf32>
      %87 = arith.subf %83, %86 : vector<16x16xf32>
      %88 = math.exp %87 : vector<16x16xf32>
      %cst_33 = arith.constant dense<0.000000e+00> : vector<16xf32>
      %89 = vector.multi_reduction <add>, %88, %cst_33 [1] : vector<16x16xf32> to vector<16xf32>
      %90 = vector.shape_cast %89 : vector<16xf32> to vector<16x1xf32>
      %91 = tpu.reciprocal %90 {approx = true} : vector<16x1xf32> -> vector<16x1xf32>
      %92 = arith.truncf %88 : vector<16x16xf32> to vector<16x16xbf16>
      %cst_34 = arith.constant dense<0.000000e+00> : vector<16x128xf32>
      %93 = tpu.matmul %92, %30, %cst_34 {dimension_numbers = #tpu.dot_dimension_numbers<[1], [0], [0], [1], [0, 0, 1, 1], [], []>} : vector<16x16xbf16>, vector<16x128xbf16>, vector<16x128xf32> -> vector<16x128xf32>
      %c32_i32_35 = arith.constant 32 : i32
      %94 = vector.broadcast %c32_i32_35 : i32 to vector<1x128xi32>
      %95 = arith.cmpi sge, %35, %94 : vector<1x128xi32>
      %c64_i32 = arith.constant 64 : i32
      %96 = vector.broadcast %c64_i32 : i32 to vector<1x128xi32>
      %97 = arith.cmpi slt, %35, %96 : vector<1x128xi32>
      %98 = arith.andi %95, %97 : vector<1x128xi1>
      %cst_36 = arith.constant 1.000000e+00 : f32
      %cst_37 = arith.constant 0.000000e+00 : f32
      %99 = vector.broadcast %cst_36 : f32 to vector<1x128xf32>
      %100 = vector.broadcast %cst_37 : f32 to vector<1x128xf32>
      %101 = arith.select %98, %99, %100 : vector<1x128xi1>, vector<1x128xf32>
      %102 = vector.broadcast %91 : vector<16x1xf32> to vector<16x128xf32>
      %103 = vector.broadcast %101 : vector<1x128xf32> to vector<16x128xf32>
      %104 = arith.mulf %102, %103 : vector<16x128xf32>
      %105 = arith.mulf %93, %104 : vector<16x128xf32>
      %106 = arith.addf %71, %105 : vector<16x128xf32>
      %cst_38 = arith.constant 0.000000e+00 : f32
      %107 = vector.broadcast %cst_38 : f32 to vector<16x128xf32>
      %108 = arith.maximumf %106, %107 : vector<16x128xf32>
      %109 = arith.truncf %108 : vector<16x128xf32> to vector<16x128xbf16>
      %c0_39 = arith.constant 0 : index
      %c0_40 = arith.constant 0 : index
      %110 = vector.load %arg7[%c0_39, %c0_40] : memref<128x128xbf16, #tpu.memory_space<vmem>>, vector<128x128xbf16>
      %cst_41 = arith.constant dense<0.000000e+00> : vector<16x128xf32>
      %111 = tpu.matmul %109, %110, %cst_41 {dimension_numbers = #tpu.dot_dimension_numbers<[1], [0], [0], [1], [0, 0, 1, 1], [], []>} : vector<16x128xbf16>, vector<128x128xbf16>, vector<16x128xf32> -> vector<16x128xf32>
      %112 = arith.truncf %111 : vector<16x128xf32> to vector<16x128xbf16>
      %113 = arith.index_cast %1 : i32 to index
      %c0_42 = arith.constant 0 : index
      %114 = vector.load %arg13[%113, %c0_42] : memref<16x128xbf16, #tpu.memory_space<vmem>>, vector<16x128xbf16>
      tpu.vector_store %arg13[%113, %c0_42], %112 {strides = array<i32>} : memref<16x128xbf16, #tpu.memory_space<vmem>>, vector<16x128xbf16>,
    } else {
    }
    %c2_i32 = arith.constant 2 : i32
    %13 = arith.cmpi eq, %arg0, %c2_i32 : i32
    %c0_i32_5 = arith.constant 0 : i32
    %14 = arith.cmpi eq, %arg1, %c0_i32_5 : i32
    %15 = arith.andi %13, %14 : i1
    %16 = arith.extui %15 : i1 to i32
    %c0_i32_6 = arith.constant 0 : i32
    %17 = arith.cmpi ne, %16, %c0_i32_6 : i32
    scf.if %17 {
      %c0 = arith.constant 0 : index
      %c0_9 = arith.constant 0 : index
      %21 = vector.load %arg8[%c0, %c0_9] : memref<8x128xbf16, #tpu.memory_space<vmem>>, vector<8x128xbf16>
      %c0_10 = arith.constant 0 : index
      %c0_11 = arith.constant 0 : index
      %22 = vector.load %arg13[%c0_10, %c0_11] : memref<16x128xbf16, #tpu.memory_space<vmem>>, vector<16x128xbf16>
      %cst = arith.constant dense<0.000000e+00> : vector<8x16xf32>
      %23 = tpu.matmul %21, %22, %cst {dimension_numbers = #tpu.dot_dimension_numbers<[1], [1], [0], [0], [0, 0, 1, 0], [], []>} : vector<8x128xbf16>, vector<16x128xbf16>, vector<8x16xf32> -> vector<8x16xf32>
      %c0_12 = arith.constant 0 : index
      %c0_13 = arith.constant 0 : index
      %24 = vector.load %arg14[%c0_12, %c0_13] : memref<8x16xf32, #tpu.memory_space<vmem>>, vector<8x16xf32>
      tpu.vector_store %arg14[%c0_12, %c0_13], %23 {strides = array<i32>} : memref<8x16xf32, #tpu.memory_space<vmem>>, vector<8x16xf32>,
    } else {
    }
    %c2_i32_7 = arith.constant 2 : i32
    %18 = arith.cmpi eq, %arg0, %c2_i32_7 : i32
    %19 = arith.extui %18 : i1 to i32
    %c0_i32_8 = arith.constant 0 : i32
    %20 = arith.cmpi ne, %19, %c0_i32_8 : i32
    scf.if %20 {
      %c0 = arith.constant 0 : index
      %c0_9 = arith.constant 0 : index
      %21 = vector.load %arg2[%c0, %c0_9] : memref<16x16xbf16, #tpu.memory_space<vmem>>, vector<16x16xbf16>
      %22 = tpu.iota {dimensions = array<i32: 1>} : vector<16x16xi32>
      %23 = tpu.iota {dimensions = array<i32: 0>} : vector<16x16xi32>
      %24 = vector.broadcast %1 : i32 to vector<16x16xi32>
      %25 = arith.addi %23, %24 : vector<16x16xi32>
      %cst = arith.constant 0.000000e+00 : bf16
      %26 = vector.broadcast %cst : bf16 to vector<16x16xbf16>
      %27 = arith.cmpf one, %21, %26 : vector<16x16xbf16>
      %28 = arith.cmpi eq, %22, %25 : vector<16x16xi32>
      %29 = arith.ori %27, %28 : vector<16x16xi1>
      %c0_10 = arith.constant 0 : index
      %c0_11 = arith.constant 0 : index
      %30 = vector.load %arg13[%c0_10, %c0_11] : memref<16x128xbf16, #tpu.memory_space<vmem>>, vector<16x128xbf16>
      %31 = arith.index_cast %1 : i32 to index
      %c0_12 = arith.constant 0 : index
      %32 = vector.load %arg13[%31, %c0_12] : memref<16x128xbf16, #tpu.memory_space<vmem>>, vector<16x128xbf16>
      %c0_13 = arith.constant 0 : index
      %c0_14 = arith.constant 0 : index
      %33 = vector.load %arg9[%c0_13, %c0_14] : memref<8x128xbf16, #tpu.memory_space<vmem>>, vector<8x128xbf16>
      %cst_15 = arith.constant dense<0.000000e+00> : vector<16x8xf32>
      %34 = tpu.matmul %32, %33, %cst_15 {dimension_numbers = #tpu.dot_dimension_numbers<[1], [1], [0], [0], [0, 0, 1, 0], [], []>} : vector<16x128xbf16>, vector<8x128xbf16>, vector<16x8xf32> -> vector<16x8xf32>
      %35 = tpu.iota {dimensions = array<i32: 1>} : vector<1x128xi32>
      %cst_16 = arith.constant 0.000000e+00 : f32
      %36 = vector.broadcast %cst_16 : f32 to vector<16x128xf32>
      %37 = vector.extract_strided_slice %34 {offsets = [0, 0], sizes = [16, 1], strides = [1, 1]} : vector<16x8xf32> to vector<16x1xf32>
      %c0_17 = arith.constant 0 : index
      %c0_18 = arith.constant 0 : index
      %38 = vector.load %arg14[%c0_17, %c0_18] : memref<8x16xf32, #tpu.memory_space<vmem>>, vector<1x16xf32>
      %39 = vector.broadcast %37 : vector<16x1xf32> to vector<16x16xf32>
      %40 = vector.broadcast %38 : vector<1x16xf32> to vector<16x16xf32>
      %41 = arith.addf %39, %40 : vector<16x16xf32>
      %cst_19 = arith.constant 0.000000e+00 : f32
      %42 = vector.broadcast %cst_19 : f32 to vector<16x16xf32>
      %43 = arith.cmpf oge, %41, %42 : vector<16x16xf32>
      %cst_20 = arith.constant 2.000000e-01 : f32
      %44 = vector.broadcast %cst_20 : f32 to vector<16x16xf32>
      %45 = arith.mulf %44, %41 : vector<16x16xf32>
      %46 = arith.select %43, %41, %45 : vector<16x16xi1>, vector<16x16xf32>
      %cst_21 = arith.constant -1.000000e+30 : f32
      %47 = vector.broadcast %cst_21 : f32 to vector<16x16xf32>
      %48 = arith.select %29, %46, %47 : vector<16x16xi1>, vector<16x16xf32>
      %cst_22 = arith.constant dense<0xFF800000> : vector<16xf32>
      %49 = vector.multi_reduction <maximumf>, %48, %cst_22 [1] : vector<16x16xf32> to vector<16xf32>
      %50 = vector.shape_cast %49 : vector<16xf32> to vector<16x1xf32>
      %51 = vector.broadcast %50 : vector<16x1xf32> to vector<16x16xf32>
      %52 = arith.subf %48, %51 : vector<16x16xf32>
      %53 = math.exp %52 : vector<16x16xf32>
      %cst_23 = arith.constant dense<0.000000e+00> : vector<16xf32>
      %54 = vector.multi_reduction <add>, %53, %cst_23 [1] : vector<16x16xf32> to vector<16xf32>
      %55 = vector.shape_cast %54 : vector<16xf32> to vector<16x1xf32>
      %56 = tpu.reciprocal %55 {approx = true} : vector<16x1xf32> -> vector<16x1xf32>
      %57 = arith.truncf %53 : vector<16x16xf32> to vector<16x16xbf16>
      %cst_24 = arith.constant dense<0.000000e+00> : vector<16x128xf32>
      %58 = tpu.matmul %57, %30, %cst_24 {dimension_numbers = #tpu.dot_dimension_numbers<[1], [0], [0], [1], [0, 0, 1, 1], [], []>} : vector<16x16xbf16>, vector<16x128xbf16>, vector<16x128xf32> -> vector<16x128xf32>
      %c0_i32_25 = arith.constant 0 : i32
      %59 = vector.broadcast %c0_i32_25 : i32 to vector<1x128xi32>
      %60 = arith.cmpi sge, %35, %59 : vector<1x128xi32>
      %c4_i32 = arith.constant 4 : i32
      %61 = vector.broadcast %c4_i32 : i32 to vector<1x128xi32>
      %62 = arith.cmpi slt, %35, %61 : vector<1x128xi32>
      %63 = arith.andi %60, %62 : vector<1x128xi1>
      %cst_26 = arith.constant 1.000000e+00 : f32
      %cst_27 = arith.constant 0.000000e+00 : f32
      %64 = vector.broadcast %cst_26 : f32 to vector<1x128xf32>
      %65 = vector.broadcast %cst_27 : f32 to vector<1x128xf32>
      %66 = arith.select %63, %64, %65 : vector<1x128xi1>, vector<1x128xf32>
      %67 = vector.broadcast %56 : vector<16x1xf32> to vector<16x128xf32>
      %68 = vector.broadcast %66 : vector<1x128xf32> to vector<16x128xf32>
      %69 = arith.mulf %67, %68 : vector<16x128xf32>
      %70 = arith.mulf %58, %69 : vector<16x128xf32>
      %71 = arith.addf %36, %70 : vector<16x128xf32>
      %72 = vector.extract_strided_slice %34 {offsets = [0, 1], sizes = [16, 1], strides = [1, 1]} : vector<16x8xf32> to vector<16x1xf32>
      %c1 = arith.constant 1 : index
      %c0_28 = arith.constant 0 : index
      %73 = vector.load %arg14[%c1, %c0_28] : memref<8x16xf32, #tpu.memory_space<vmem>>, vector<1x16xf32>
      %74 = vector.broadcast %72 : vector<16x1xf32> to vector<16x16xf32>
      %75 = vector.broadcast %73 : vector<1x16xf32> to vector<16x16xf32>
      %76 = arith.addf %74, %75 : vector<16x16xf32>
      %cst_29 = arith.constant 0.000000e+00 : f32
      %77 = vector.broadcast %cst_29 : f32 to vector<16x16xf32>
      %78 = arith.cmpf oge, %76, %77 : vector<16x16xf32>
      %cst_30 = arith.constant 2.000000e-01 : f32
      %79 = vector.broadcast %cst_30 : f32 to vector<16x16xf32>
      %80 = arith.mulf %79, %76 : vector<16x16xf32>
      %81 = arith.select %78, %76, %80 : vector<16x16xi1>, vector<16x16xf32>
      %cst_31 = arith.constant -1.000000e+30 : f32
      %82 = vector.broadcast %cst_31 : f32 to vector<16x16xf32>
      %83 = arith.select %29, %81, %82 : vector<16x16xi1>, vector<16x16xf32>
      %cst_32 = arith.constant dense<0xFF800000> : vector<16xf32>
      %84 = vector.multi_reduction <maximumf>, %83, %cst_32 [1] : vector<16x16xf32> to vector<16xf32>
      %85 = vector.shape_cast %84 : vector<16xf32> to vector<16x1xf32>
      %86 = vector.broadcast %85 : vector<16x1xf32> to vector<16x16xf32>
      %87 = arith.subf %83, %86 : vector<16x16xf32>
      %88 = math.exp %87 : vector<16x16xf32>
      %cst_33 = arith.constant dense<0.000000e+00> : vector<16xf32>
      %89 = vector.multi_reduction <add>, %88, %cst_33 [1] : vector<16x16xf32> to vector<16xf32>
      %90 = vector.shape_cast %89 : vector<16xf32> to vector<16x1xf32>
      %91 = tpu.reciprocal %90 {approx = true} : vector<16x1xf32> -> vector<16x1xf32>
      %92 = arith.truncf %88 : vector<16x16xf32> to vector<16x16xbf16>
      %cst_34 = arith.constant dense<0.000000e+00> : vector<16x128xf32>
      %93 = tpu.matmul %92, %30, %cst_34 {dimension_numbers = #tpu.dot_dimension_numbers<[1], [0], [0], [1], [0, 0, 1, 1], [], []>} : vector<16x16xbf16>, vector<16x128xbf16>, vector<16x128xf32> -> vector<16x128xf32>
      %c4_i32_35 = arith.constant 4 : i32
      %94 = vector.broadcast %c4_i32_35 : i32 to vector<1x128xi32>
      %95 = arith.cmpi sge, %35, %94 : vector<1x128xi32>
      %c8_i32 = arith.constant 8 : i32
      %96 = vector.broadcast %c8_i32 : i32 to vector<1x128xi32>
      %97 = arith.cmpi slt, %35, %96 : vector<1x128xi32>
      %98 = arith.andi %95, %97 : vector<1x128xi1>
      %cst_36 = arith.constant 1.000000e+00 : f32
      %cst_37 = arith.constant 0.000000e+00 : f32
      %99 = vector.broadcast %cst_36 : f32 to vector<1x128xf32>
      %100 = vector.broadcast %cst_37 : f32 to vector<1x128xf32>
      %101 = arith.select %98, %99, %100 : vector<1x128xi1>, vector<1x128xf32>
      %102 = vector.broadcast %91 : vector<16x1xf32> to vector<16x128xf32>
      %103 = vector.broadcast %101 : vector<1x128xf32> to vector<16x128xf32>
      %104 = arith.mulf %102, %103 : vector<16x128xf32>
      %105 = arith.mulf %93, %104 : vector<16x128xf32>
      %106 = arith.addf %71, %105 : vector<16x128xf32>
      %c0_38 = arith.constant 0 : index
      %c0_39 = arith.constant 0 : index
      %107 = vector.load %arg10[%c0_38, %c0_39] : memref<16x128xf32, #tpu.memory_space<vmem>>, vector<16x128xf32>
      tpu.vector_store %arg10[%c0_38, %c0_39], %106 {strides = array<i32>} : memref<16x128xf32, #tpu.memory_space<vmem>>, vector<16x128xf32>,
    } else {
    }
    return
  }
  func.func @transform_0(%arg0: i32, %arg1: i32) -> (i32, i32) {
    %c0_i32 = arith.constant 0 : i32
    %0 = arith.cmpi sgt, %arg0, %c0_i32 : i32
    %c0_i32_0 = arith.constant 0 : i32
    %1 = arith.select %0, %arg1, %c0_i32_0 : i32
    %c0_i32_1 = arith.constant 0 : i32
    %c0_i32_2 = arith.constant 0 : i32
    return %1, %c0_i32_1 : i32, i32
  }
  func.func @transform_1(%arg0: i32, %arg1: i32) -> (i32, i32) {
    %c0_i32 = arith.constant 0 : i32
    %0 = arith.cmpi eq, %arg0, %c0_i32 : i32
    %c0_i32_0 = arith.constant 0 : i32
    %1 = arith.select %0, %arg1, %c0_i32_0 : i32
    %c0_i32_1 = arith.constant 0 : i32
    %c0_i32_2 = arith.constant 0 : i32
    return %1, %c0_i32_1 : i32, i32
  }
  func.func @transform_2(%arg0: i32, %arg1: i32) -> (i32, i32) {
    %c0_i32 = arith.constant 0 : i32
    %c0_i32_0 = arith.constant 0 : i32
    %c0_i32_1 = arith.constant 0 : i32
    return %c0_i32, %c0_i32_0 : i32, i32
  }
  func.func @transform_3(%arg0: i32, %arg1: i32) -> (i32, i32) {
    %c0_i32 = arith.constant 0 : i32
    %c0_i32_0 = arith.constant 0 : i32
    %c0_i32_1 = arith.constant 0 : i32
    return %c0_i32, %c0_i32_0 : i32, i32
  }
  func.func @transform_4(%arg0: i32, %arg1: i32) -> (i32, i32) {
    %c0_i32 = arith.constant 0 : i32
    %c0_i32_0 = arith.constant 0 : i32
    %c0_i32_1 = arith.constant 0 : i32
    return %c0_i32, %c0_i32_0 : i32, i32
  }
  func.func @transform_5(%arg0: i32, %arg1: i32) -> (i32, i32) {
    %c0_i32 = arith.constant 0 : i32
    %c0_i32_0 = arith.constant 0 : i32
    %c0_i32_1 = arith.constant 0 : i32
    return %c0_i32, %c0_i32_0 : i32, i32
  }
  func.func @transform_6(%arg0: i32, %arg1: i32) -> (i32, i32) {
    %c0_i32 = arith.constant 0 : i32
    %c0_i32_0 = arith.constant 0 : i32
    %c0_i32_1 = arith.constant 0 : i32
    return %c0_i32, %c0_i32_0 : i32, i32
  }
  func.func @transform_7(%arg0: i32, %arg1: i32) -> (i32, i32) {
    %c0_i32 = arith.constant 0 : i32
    %c0_i32_0 = arith.constant 0 : i32
    %c0_i32_1 = arith.constant 0 : i32
    return %c0_i32, %c0_i32_0 : i32, i32
  }
  func.func @transform_8(%arg0: i32, %arg1: i32) -> (i32, i32) {
    %c2_i32 = arith.constant 2 : i32
    %0 = arith.cmpi eq, %arg0, %c2_i32 : i32
    %c0_i32 = arith.constant 0 : i32
    %1 = arith.select %0, %arg1, %c0_i32 : i32
    %c0_i32_0 = arith.constant 0 : i32
    %c0_i32_1 = arith.constant 0 : i32
    return %1, %c0_i32_0 : i32, i32
  }
}

</mosaic_0001>

<llo_original>
// kernel: tpu_custom_call.1
$region0: #{tpu_custom_call.1}
  #allocation0 [shape = 'u32[]', space=smem, size = 0x4, offset = 0x4, fixed_abs, tag = 'smem constant byte address 0x4 - core index']
  #allocation1 [shape = 'u32[72,128]{1,0:T(1,128)}', space=vmem, size = 0x9000, scoped, tag = 'internal scratch']
  #allocation2 [shape = 'bf16[16,128]{1,0:T(8,128)(2,1)}', space=vmem, size = 0x1000, scoped, tag = 'scratch operand']
  #allocation3 [shape = 'f32[8,16]{1,0:T(8,128)}', space=vmem, size = 0x1000, scoped, tag = 'scratch operand']
  #allocation4 [shape = 'bf16[16,128]{1,0:T(8,128)(2,1)}', space=vmem, size = 0x1000, scoped, tag = 'scratch operand']
  #allocation5 [shape = 'f32[8,16]{1,0:T(8,128)}', space=vmem, size = 0x1000, scoped, tag = 'scratch operand']
  %s0 = inlined_call_operand.hbm [shape: bf16[16,16], index: 0, kind: input, shape index: {}]
  %s1 = inlined_call_operand.hbm [shape: bf16[16,128], index: 1, kind: input, shape index: {}]
  %s2 = inlined_call_operand.hbm [shape: bf16[128,128], index: 2, kind: input, shape index: {}]
  %s3 = inlined_call_operand.hbm [shape: bf16[8,128], index: 3, kind: input, shape index: {}]
  %s4 = inlined_call_operand.hbm [shape: bf16[8,128], index: 4, kind: input, shape index: {}]
  %s5 = inlined_call_operand.hbm [shape: bf16[128,128], index: 5, kind: input, shape index: {}]
  %s6 = inlined_call_operand.vmem [shape: bf16[8,128], index: 6, kind: input, shape index: {}]
  %s7 = inlined_call_operand.hbm [shape: bf16[8,128], index: 7, kind: input, shape index: {}]
  %s8 = inlined_call_operand.hbm [shape: f32[16,128], index: 8, kind: output, shape index: {}]
  %s9 = sld [smem:[#allocation0]]
  $region113: #{tpu_custom_call.1} parent=0
    _
  %s11 = ssub.s32 1, %s9
  %s12 = scalar_select 0, %s11, %s9
  $region1: #{tpu_custom_call.1} parent=0
    #allocation6 [shape = 'u8[8192]{0}', space=vmem, size = 0x2000, scoped, tag = 'input window, operand 0']
    #allocation7 [shape = 's32[2]{0}', space=sflag, size = 0x8, scoped, tag = 'scoped memory for tpu_custom_call.1']
    #allocation8 [shape = 's32[2]{0}', space=sflag, size = 0x8, scoped, tag = 'scoped memory for tpu_custom_call.1']
    #allocation9 [shape = 'u8[8192]{0}', space=vmem, size = 0x2000, scoped, tag = 'input window, operand 1']
    #allocation10 [shape = 's32[2]{0}', space=sflag, size = 0x8, scoped, tag = 'scoped memory for tpu_custom_call.1']
    #allocation11 [shape = 'u8[32768]{0}', space=vmem, size = 0x8000, scoped, tag = 'input window, operand 2, single buffered']
    #allocation12 [shape = 'u8[2048]{0}', space=vmem, size = 0x800, scoped, tag = 'input window, operand 3, single buffered']
    #allocation13 [shape = 's32[1]{0}', space=sflag, size = 0x4, scoped, tag = 'scoped memory for tpu_custom_call.1']
    #allocation14 [shape = 'u8[2048]{0}', space=vmem, size = 0x800, scoped, tag = 'input window, operand 4, single buffered']
    #allocation15 [shape = 'u8[32768]{0}', space=vmem, size = 0x8000, scoped, tag = 'input window, operand 5, single buffered']
    #allocation16 [shape = 's32[1]{0}', space=sflag, size = 0x4, scoped, tag = 'scoped memory for tpu_custom_call.1']
    #allocation17 [shape = 'u8[2048]{0}', space=vmem, size = 0x800, scoped, tag = 'input window, operand 7, single buffered']
    #allocation18 [shape = 'u8[16384]{0}', space=vmem, size = 0x4000, scoped, tag = 'output window, operand 0']
    %13 = vsyncpa [#allocation7], 0
    %s14 = scalar_lea.sflag [#allocation7], 1
    %15 = vsyncpa %s14, 0
    %16 = vsyncpa [#allocation10], 0
    %s17 = scalar_lea.sflag [#allocation10], 1
    %18 = vsyncpa %s17, 0
    %19 = vsyncpa [#allocation13], 0
    %20 = vsyncpa [#allocation16], 0
    %21 = vsyncpa [#allocation8], 0
    %s22 = scalar_lea.sflag [#allocation8], 1
    %23 = vsyncpa %s22, 0
    loop: start=0, step=1, limit=5
    $region2: #{tpu_custom_call.1} parent=1 // loop_pre_header
      _
    $region3: #{tpu_custom_call.1} parent=1 // loop_header
      %s25 = sphi 0, %s29
      %p26 = scmp.ge.s32.totalorder %s25, 5
      %s32 = sphi 0, %s44
      %s33 = sphi 0, %s40
      %s34 = sphi 0, %s32
      %s35 = sphi 0, %s33
      %s36 = sphi 0, %s34
      %s37 = sphi 0, %s35
      %s51 = sphi 0, %s53
      %s54 = sphi 0, %s51
      %s55 = sphi 0, %s54
      %s71 = sphi 0, %s55
      %s81 = sphi 0, %s83
      %s84 = sphi 0, %s81
      %s85 = sphi 0, %s84
      %s101 = sphi 0, %s85
      %s105 = sphi 0, %s105
      %s107 = sphi 0, %s105
      %s108 = sphi 0, %s107
      %s122 = sphi 0, %s108
      %s126 = sphi 0, %s126
      %s128 = sphi 0, %s126
      %s129 = sphi 0, %s128
      %s143 = sphi 0, %s129
      %s147 = sphi 0, %s147
      %s149 = sphi 0, %s147
      %s150 = sphi 0, %s149
      %s164 = sphi 0, %s150
      %s168 = sphi 0, %s168
      %s170 = sphi 0, %s168
      %s171 = sphi 0, %s170
      %s185 = sphi 0, %s171
      %s189 = sphi 0, %s189
      %s191 = sphi 0, %s189
      %s192 = sphi 0, %s191
      %s206 = sphi 0, %s192
      %s210 = sphi 0, %s210
      %s212 = sphi 0, %s210
      %s213 = sphi 0, %s212
      %s227 = sphi 0, %s213
      %s237 = sphi 0, %s239
      %s240 = sphi 0, %s237
      %s241 = sphi 0, %s240
      %s257 = sphi 0, %s241
    $region4: #{tpu_custom_call.1} parent=1 // loop_header_branch
      %28 = sbr.rel (%p26) target = $region8
    $region5: #{tpu_custom_call.1} parent=1 // loop_body
      %s30 = ssub.s32 %s25, 1
      %s31 = ssub.s32 %s25, 2
      %s38 = sadd.s32 1, %s33
      %p39 = scmp.ge.s32.totalorder %s38, 1
      %s40 = scalar_select %p39, 0, %s38
      %s41 = sadd.s32 1, %s32
      %s42 = scalar_select %p39, %s41, %s32
      %p43 = scmp.ge.s32.totalorder %s42, 3
      %s44 = scalar_select %p43, 0, %s42
      %p45 = scmp.gt.s32.totalorder %s32, 0
      %s46 = scalar_select %p45, %s33, 0
      %p47 = scmp.gt.s32.totalorder %s44, 0
      %s48 = scalar_select %p47, %s40, 0
      %s49 = ssub.s32 %s46, %s48
      %p50 = scmp.eq.s32.totalorder %s49, 0
      %s52 = sadd.s32 %s51, 1
      %s53 = scalar_select %p50, %s51, %s52
      %p56 = pneg %p50
      %p57 = scmp.eq.s32.totalorder %s25, 2
      %p58 = por %p56, %p57
      %p59 = scmp.ne.s32.totalorder %s51, %s54
      %p60 = scmp.eq.s32.totalorder %s25, 0
      %p61 = por %p59, %p60
      %p62 = scmp.ne.s32.totalorder %s51, %s54
      %p63 = scmp.eq.s32.totalorder %s30, 2
      %p64 = por %p62, %p63
      %p65 = scmp.ne.s32.totalorder %s54, %s55
      %p66 = scmp.eq.s32.totalorder %s30, 0
      %p67 = por %p65, %p66
      %p68 = scmp.ne.s32.totalorder %s54, %s55
      %p69 = scmp.eq.s32.totalorder %s31, 2
      %p70 = por %p68, %p69
      %p72 = scmp.ne.s32.totalorder %s55, %s71
      %p73 = scmp.eq.s32.totalorder %s31, 0
      %p74 = por %p72, %p73
      %p75 = scmp.eq.s32.totalorder %s32, 0
      %s76 = scalar_select %p75, %s33, 0
      %p77 = scmp.eq.s32.totalorder %s44, 0
      %s78 = scalar_select %p77, %s40, 0
      %s79 = ssub.s32 %s76, %s78
      %p80 = scmp.eq.s32.totalorder %s79, 0
      %s82 = sadd.s32 %s81, 1
      %s83 = scalar_select %p80, %s81, %s82
      %p86 = pneg %p80
      %p87 = scmp.eq.s32.totalorder %s25, 2
      %p88 = por %p86, %p87
      %p89 = scmp.ne.s32.totalorder %s81, %s84
      %p90 = scmp.eq.s32.totalorder %s25, 0
      %p91 = por %p89, %p90
      %p92 = scmp.ne.s32.totalorder %s81, %s84
      %p93 = scmp.eq.s32.totalorder %s30, 2
      %p94 = por %p92, %p93
      %p95 = scmp.ne.s32.totalorder %s84, %s85
      %p96 = scmp.eq.s32.totalorder %s30, 0
      %p97 = por %p95, %p96
      %p98 = scmp.ne.s32.totalorder %s84, %s85
      %p99 = scmp.eq.s32.totalorder %s31, 2
      %p100 = por %p98, %p99
      %p102 = scmp.ne.s32.totalorder %s85, %s101
      %p103 = scmp.eq.s32.totalorder %s31, 0
      %p104 = por %p102, %p103
      %s106 = sadd.s32 %s105, 1
      %p109 = scmp.eq.s32.totalorder %s25, 2
      %p110 = scmp.ne.s32.totalorder %s105, %s107
      %p111 = scmp.eq.s32.totalorder %s25, 0
      %p112 = por %p110, %p111
      %p113 = scmp.ne.s32.totalorder %s105, %s107
      %p114 = scmp.eq.s32.totalorder %s30, 2
      %p115 = por %p113, %p114
      %p116 = scmp.ne.s32.totalorder %s107, %s108
      %p117 = scmp.eq.s32.totalorder %s30, 0
      %p118 = por %p116, %p117
      %p119 = scmp.ne.s32.totalorder %s107, %s108
      %p120 = scmp.eq.s32.totalorder %s31, 2
      %p121 = por %p119, %p120
      %p123 = scmp.ne.s32.totalorder %s108, %s122
      %p124 = scmp.eq.s32.totalorder %s31, 0
      %p125 = por %p123, %p124
      %s127 = sadd.s32 %s126, 1
      %p130 = scmp.eq.s32.totalorder %s25, 2
      %p131 = scmp.ne.s32.totalorder %s126, %s128
      %p132 = scmp.eq.s32.totalorder %s25, 0
      %p133 = por %p131, %p132
      %p134 = scmp.ne.s32.totalorder %s126, %s128
      %p135 = scmp.eq.s32.totalorder %s30, 2
      %p136 = por %p134, %p135
      %p137 = scmp.ne.s32.totalorder %s128, %s129
      %p138 = scmp.eq.s32.totalorder %s30, 0
      %p139 = por %p137, %p138
      %p140 = scmp.ne.s32.totalorder %s128, %s129
      %p141 = scmp.eq.s32.totalorder %s31, 2
      %p142 = por %p140, %p141
      %p144 = scmp.ne.s32.totalorder %s129, %s143
      %p145 = scmp.eq.s32.totalorder %s31, 0
      %p146 = por %p144, %p145
      %s148 = sadd.s32 %s147, 1
      %p151 = scmp.eq.s32.totalorder %s25, 2
      %p152 = scmp.ne.s32.totalorder %s147, %s149
      %p153 = scmp.eq.s32.totalorder %s25, 0
      %p154 = por %p152, %p153
      %p155 = scmp.ne.s32.totalorder %s147, %s149
      %p156 = scmp.eq.s32.totalorder %s30, 2
      %p157 = por %p155, %p156
      %p158 = scmp.ne.s32.totalorder %s149, %s150
      %p159 = scmp.eq.s32.totalorder %s30, 0
      %p160 = por %p158, %p159
      %p161 = scmp.ne.s32.totalorder %s149, %s150
      %p162 = scmp.eq.s32.totalorder %s31, 2
      %p163 = por %p161, %p162
      %p165 = scmp.ne.s32.totalorder %s150, %s164
      %p166 = scmp.eq.s32.totalorder %s31, 0
      %p167 = por %p165, %p166
      %s169 = sadd.s32 %s168, 1
      %p172 = scmp.eq.s32.totalorder %s25, 2
      %p173 = scmp.ne.s32.totalorder %s168, %s170
      %p174 = scmp.eq.s32.totalorder %s25, 0
      %p175 = por %p173, %p174
      %p176 = scmp.ne.s32.totalorder %s168, %s170
      %p177 = scmp.eq.s32.totalorder %s30, 2
      %p178 = por %p176, %p177
      %p179 = scmp.ne.s32.totalorder %s170, %s171
      %p180 = scmp.eq.s32.totalorder %s30, 0
      %p181 = por %p179, %p180
      %p182 = scmp.ne.s32.totalorder %s170, %s171
      %p183 = scmp.eq.s32.totalorder %s31, 2
      %p184 = por %p182, %p183
      %p186 = scmp.ne.s32.totalorder %s171, %s185
      %p187 = scmp.eq.s32.totalorder %s31, 0
      %p188 = por %p186, %p187
      %s190 = sadd.s32 %s189, 1
      %p193 = scmp.eq.s32.totalorder %s25, 2
      %p194 = scmp.ne.s32.totalorder %s189, %s191
      %p195 = scmp.eq.s32.totalorder %s25, 0
      %p196 = por %p194, %p195
      %p197 = scmp.ne.s32.totalorder %s189, %s191
      %p198 = scmp.eq.s32.totalorder %s30, 2
      %p199 = por %p197, %p198
      %p200 = scmp.ne.s32.totalorder %s191, %s192
      %p201 = scmp.eq.s32.totalorder %s30, 0
      %p202 = por %p200, %p201
      %p203 = scmp.ne.s32.totalorder %s191, %s192
      %p204 = scmp.eq.s32.totalorder %s31, 2
      %p205 = por %p203, %p204
      %p207 = scmp.ne.s32.totalorder %s192, %s206
      %p208 = scmp.eq.s32.totalorder %s31, 0
      %p209 = por %p207, %p208
      %s211 = sadd.s32 %s210, 1
      %p214 = scmp.eq.s32.totalorder %s25, 2
      %p215 = scmp.ne.s32.totalorder %s210, %s212
      %p216 = scmp.eq.s32.totalorder %s25, 0
      %p217 = por %p215, %p216
      %p218 = scmp.ne.s32.totalorder %s210, %s212
      %p219 = scmp.eq.s32.totalorder %s30, 2
      %p220 = por %p218, %p219
      %p221 = scmp.ne.s32.totalorder %s212, %s213
      %p222 = scmp.eq.s32.totalorder %s30, 0
      %p223 = por %p221, %p222
      %p224 = scmp.ne.s32.totalorder %s212, %s213
      %p225 = scmp.eq.s32.totalorder %s31, 2
      %p226 = por %p224, %p225
      %p228 = scmp.ne.s32.totalorder %s213, %s227
      %p229 = scmp.eq.s32.totalorder %s31, 0
      %p230 = por %p228, %p229
      %p231 = scmp.eq.s32.totalorder %s32, 2
      %s232 = scalar_select %p231, %s33, 0
      %p233 = scmp.eq.s32.totalorder %s44, 2
      %s234 = scalar_select %p233, %s40, 0
      %s235 = ssub.s32 %s232, %s234
      %p236 = scmp.eq.s32.totalorder %s235, 0
      %s238 = sadd.s32 %s237, 1
      %s239 = scalar_select %p236, %s237, %s238
      %p242 = pneg %p236
      %p243 = scmp.eq.s32.totalorder %s25, 2
      %p244 = por %p242, %p243
      %p245 = scmp.ne.s32.totalorder %s237, %s240
      %p246 = scmp.eq.s32.totalorder %s25, 0
      %p247 = por %p245, %p246
      %p248 = scmp.ne.s32.totalorder %s237, %s240
      %p249 = scmp.eq.s32.totalorder %s30, 2
      %p250 = por %p248, %p249
      %p251 = scmp.ne.s32.totalorder %s240, %s241
      %p252 = scmp.eq.s32.totalorder %s30, 0
      %p253 = por %p251, %p252
      %p254 = scmp.ne.s32.totalorder %s240, %s241
      %p255 = scmp.eq.s32.totalorder %s31, 2
      %p256 = por %p254, %p255
      %p258 = scmp.ne.s32.totalorder %s241, %s257
      %p259 = scmp.eq.s32.totalorder %s31, 0
      %p260 = por %p258, %p259
      %p261 = scmp.le.s32.totalorder 1, %s25
      %p262 = scmp.lt.s32.totalorder %s25, 4
      %p263 = pnand %p261, %p262
      %p264 = pneg %p263
      // Predicated region
      $region9: #{tpu_custom_call.1} parent=5 // pred_check
        _
      $region10: #{tpu_custom_call.1} parent=5 // pred_check_branch
        %266 = sbr.rel (%p263) target = $region12
      $region11: #{tpu_custom_call.1} parent=5 // pred_region
        %s267 = ssub.s32 %s25, 1
        // Predicated region
        $region13: #{tpu_custom_call.1} parent=11 // pred_check
          %p268 = pneg %p118
        $region14: #{tpu_custom_call.1} parent=11 // pred_check_branch
          %270 = sbr.rel (%p268) target = $region16
        $region15: #{tpu_custom_call.1} parent=11 // pred_region
          %272 = vsyncadd [#allocation10], 0
          %s273 = sshll.u32 %s2, 4
          %s274 = int_to_ptr.hbm [resolvable:$true] %s273
          %s275 = sshll.u32 [#allocation11], 4
          %s276 = int_to_ptr.vmem [resolvable:$true] %s275
          %281 = dma.hbm_to_vmem [thread:$0]  %s274, 1024, %s276, [#allocation10], 64, 64, 4
        $region16: #{tpu_custom_call.1} parent=11 // pred_fallthru
          _
        // Predicated region
        $region17: #{tpu_custom_call.1} parent=11 // pred_check
          %p282 = pneg %p139
        $region18: #{tpu_custom_call.1} parent=11 // pred_check_branch
          %284 = sbr.rel (%p282) target = $region20
        $region19: #{tpu_custom_call.1} parent=11 // pred_region
          %286 = vsyncadd [#allocation13], 0
          %s288 = sshll.u32 %s3, 4
          %s289 = int_to_ptr.hbm [resolvable:$true] %s288
          %s290 = sshll.u32 [#allocation12], 4
          %s291 = int_to_ptr.vmem [resolvable:$true] %s290
          %293 = dma.hbm_to_vmem [thread:$0]  %s289, 64, %s291, [#allocation13]
        $region20: #{tpu_custom_call.1} parent=11 // pred_fallthru
          _
        // Predicated region
        $region21: #{tpu_custom_call.1} parent=11 // pred_check
          %p294 = pneg %p160
        $region22: #{tpu_custom_call.1} parent=11 // pred_check_branch
          %296 = sbr.rel (%p294) target = $region24
        $region23: #{tpu_custom_call.1} parent=11 // pred_region
          %298 = vsyncadd [#allocation13], 0
          %s300 = sshll.u32 %s4, 4
          %s301 = int_to_ptr.hbm [resolvable:$true] %s300
          %s302 = sshll.u32 [#allocation14], 4
          %s303 = int_to_ptr.vmem [resolvable:$true] %s302
          %305 = dma.hbm_to_vmem [thread:$0]  %s301, 64, %s303, [#allocation13]
        $region24: #{tpu_custom_call.1} parent=11 // pred_fallthru
          _
        // Predicated region
        $region25: #{tpu_custom_call.1} parent=11 // pred_check
          %p306 = pneg %p181
        $region26: #{tpu_custom_call.1} parent=11 // pred_check_branch
          %308 = sbr.rel (%p306) target = $region28
        $region27: #{tpu_custom_call.1} parent=11 // pred_region
          %310 = vsyncadd [#allocation16], 0
          %s311 = sshll.u32 %s5, 4
          %s312 = int_to_ptr.hbm [resolvable:$true] %s311
          %s313 = sshll.u32 [#allocation15], 4
          %s314 = int_to_ptr.vmem [resolvable:$true] %s313
          %319 = dma.hbm_to_vmem [thread:$0]  %s312, 1024, %s314, [#allocation16], 64, 64, 4
        $region28: #{tpu_custom_call.1} parent=11 // pred_fallthru
          _
        // Predicated region
        $region29: #{tpu_custom_call.1} parent=11 // pred_check
          %p320 = pneg %p202
        $region30: #{tpu_custom_call.1} parent=11 // pred_check_branch
          %322 = sbr.rel (%p320) target = $region32
        $region31: #{tpu_custom_call.1} parent=11 // pred_region
          _
        $region32: #{tpu_custom_call.1} parent=11 // pred_fallthru
          _
        // Predicated region
        $region33: #{tpu_custom_call.1} parent=11 // pred_check
          %p323 = pneg %p223
        $region34: #{tpu_custom_call.1} parent=11 // pred_check_branch
          %325 = sbr.rel (%p323) target = $region36
        $region35: #{tpu_custom_call.1} parent=11 // pred_region
          %327 = vsyncadd [#allocation16], 0
          %s329 = sshll.u32 %s7, 4
          %s330 = int_to_ptr.hbm [resolvable:$true] %s329
          %s331 = sshll.u32 [#allocation17], 4
          %s332 = int_to_ptr.vmem [resolvable:$true] %s331
          %334 = dma.hbm_to_vmem [thread:$0]  %s330, 64, %s332, [#allocation16]
        $region36: #{tpu_custom_call.1} parent=11 // pred_fallthru
          _
      $region12: #{tpu_custom_call.1} parent=5 // pred_fallthru
        _
      %p335 = scmp.lt.s32.totalorder %s25, 3
      // Predicated region
      $region37: #{tpu_custom_call.1} parent=5 // pred_check
        %p336 = pneg %p335
      $region38: #{tpu_custom_call.1} parent=5 // pred_check_branch
        %338 = sbr.rel (%p336) target = $region40
      $region39: #{tpu_custom_call.1} parent=5 // pred_region
        // Predicated region
        $region41: #{tpu_custom_call.1} parent=39 // pred_check
          %p339 = pneg %p61
        $region42: #{tpu_custom_call.1} parent=39 // pred_check_branch
          %341 = sbr.rel (%p339) target = $region44
        $region43: #{tpu_custom_call.1} parent=39 // pred_region
          %s342 = sand.u32 %s51, 1
          %s343 = scalar_lea.sflag [#allocation7], %s342
          %s344 = sand.u32 %s51, 1
          %s345 = smul.addr %s344, 8
          %s346 = scalar_lea.vmem [#allocation6], %s345
          %p347 = scmp.gt.s32.totalorder %s32, 0
          %s348 = scalar_select %p347, %s33, 0
          %s349 = smul.u32 2, %s348
          %351 = vsyncadd %s343, 0
          %s352 = smul.addr %s349, 4
          %s353 = scalar_lea.hbm %s0, %s352
          %s354 = sshll.u32 %s353, 4
          %s355 = int_to_ptr.hbm [resolvable:$true] %s354
          %s356 = sshll.u32 %s346, 4
          %s357 = int_to_ptr.vmem [resolvable:$true] %s356
          %362 = dma.hbm_to_vmem [thread:$0]  %s355, 128, %s357, %s343, 64, 64, 4
        $region44: #{tpu_custom_call.1} parent=39 // pred_fallthru
          _
        // Predicated region
        $region45: #{tpu_custom_call.1} parent=39 // pred_check
          %p363 = pneg %p91
        $region46: #{tpu_custom_call.1} parent=39 // pred_check_branch
          %365 = sbr.rel (%p363) target = $region48
        $region47: #{tpu_custom_call.1} parent=39 // pred_region
          %s366 = sand.u32 %s25, 1
          %s367 = scalar_lea.sflag [#allocation10], %s366
          %s368 = sand.u32 %s81, 1
          %s369 = smul.addr %s368, 8
          %s370 = scalar_lea.vmem [#allocation9], %s369
          %p371 = scmp.eq.s32.totalorder %s32, 0
          %s372 = scalar_select %p371, %s33, 0
          %s373 = smul.u32 2, %s372
          %375 = vsyncadd %s367, 0
          %s376 = smul.addr %s373, 4
          %s377 = scalar_lea.hbm %s1, %s376
          %s378 = sshll.u32 %s377, 4
          %s379 = int_to_ptr.hbm [resolvable:$true] %s378
          %s380 = sshll.u32 %s370, 4
          %s381 = int_to_ptr.vmem [resolvable:$true] %s380
          %386 = dma.hbm_to_vmem [thread:$0]  %s379, 128, %s381, %s367, 64, 64, 4
        $region48: #{tpu_custom_call.1} parent=39 // pred_fallthru
          _
      $region40: #{tpu_custom_call.1} parent=5 // pred_fallthru
        _
      %p387 = scmp.le.s32.totalorder 1, %s25
      %p388 = scmp.lt.s32.totalorder %s25, 4
      %p389 = pnand %p387, %p388
      %p390 = pneg %p389
      // Predicated region
      $region49: #{tpu_custom_call.1} parent=5 // pred_check
        _
      $region50: #{tpu_custom_call.1} parent=5 // pred_check_branch
        %392 = sbr.rel (%p389) target = $region52
      $region51: #{tpu_custom_call.1} parent=5 // pred_region
        %s393 = ssub.s32 %s25, 1
        %s394 = sand.u32 %s54, 1
        %s395 = scalar_lea.sflag [#allocation7], %s394
        %s396 = sand.u32 %s54, 1
        %s397 = smul.addr %s396, 8
        %s398 = scalar_lea.vmem [#allocation6], %s397
        // Predicated region
        $region53: #{tpu_custom_call.1} parent=51 // pred_check
          %p399 = pneg %p67
        $region54: #{tpu_custom_call.1} parent=51 // pred_check_branch
          %401 = sbr.rel (%p399) target = $region56
        $region55: #{tpu_custom_call.1} parent=51 // pred_region
          %403 = dma.done %s395, 128
        $region56: #{tpu_custom_call.1} parent=51 // pred_fallthru
          _
        %s404 = sand.u32 %s30, 1
        %s405 = scalar_lea.sflag [#allocation10], %s404
        %s406 = sand.u32 %s84, 1
        %s407 = smul.addr %s406, 8
        %s408 = scalar_lea.vmem [#allocation9], %s407
        // Predicated region
        $region57: #{tpu_custom_call.1} parent=51 // pred_check
          %p409 = pneg %p97
        $region58: #{tpu_custom_call.1} parent=51 // pred_check_branch
          %411 = sbr.rel (%p409) target = $region60
        $region59: #{tpu_custom_call.1} parent=51 // pred_region
          %413 = dma.done %s405, 128
        $region60: #{tpu_custom_call.1} parent=51 // pred_fallthru
          _
        // Predicated region
        $region61: #{tpu_custom_call.1} parent=51 // pred_check
          %p414 = pneg %p118
        $region62: #{tpu_custom_call.1} parent=51 // pred_check_branch
          %416 = sbr.rel (%p414) target = $region64
        $region63: #{tpu_custom_call.1} parent=51 // pred_region
          %418 = dma.done [#allocation10], 1024
        $region64: #{tpu_custom_call.1} parent=51 // pred_fallthru
          _
        // Predicated region
        $region65: #{tpu_custom_call.1} parent=51 // pred_check
          %p419 = pneg %p139
        $region66: #{tpu_custom_call.1} parent=51 // pred_check_branch
          %421 = sbr.rel (%p419) target = $region68
        $region67: #{tpu_custom_call.1} parent=51 // pred_region
          %423 = dma.done [#allocation13], 64
        $region68: #{tpu_custom_call.1} parent=51 // pred_fallthru
          _
        // Predicated region
        $region69: #{tpu_custom_call.1} parent=51 // pred_check
          %p424 = pneg %p160
        $region70: #{tpu_custom_call.1} parent=51 // pred_check_branch
          %426 = sbr.rel (%p424) target = $region72
        $region71: #{tpu_custom_call.1} parent=51 // pred_region
          %428 = dma.done [#allocation13], 64
        $region72: #{tpu_custom_call.1} parent=51 // pred_fallthru
          _
        // Predicated region
        $region73: #{tpu_custom_call.1} parent=51 // pred_check
          %p429 = pneg %p181
        $region74: #{tpu_custom_call.1} parent=51 // pred_check_branch
          %431 = sbr.rel (%p429) target = $region76
        $region75: #{tpu_custom_call.1} parent=51 // pred_region
          %433 = dma.done [#allocation16], 1024
        $region76: #{tpu_custom_call.1} parent=51 // pred_fallthru
          _
        // Predicated region
        $region77: #{tpu_custom_call.1} parent=51 // pred_check
          %p434 = pneg %p223
        $region78: #{tpu_custom_call.1} parent=51 // pred_check_branch
          %436 = sbr.rel (%p434) target = $region80
        $region79: #{tpu_custom_call.1} parent=51 // pred_region
          %438 = dma.done [#allocation16], 64
        $region80: #{tpu_custom_call.1} parent=51 // pred_fallthru
          _
        %s439 = sand.u32 %s54, 1
        %s440 = scalar_lea.sflag [#allocation7], %s439
        %s441 = sand.u32 %s54, 1
        %s442 = smul.addr %s441, 8
        %s443 = scalar_lea.vmem [#allocation6], %s442
        %p444 = pneg %p67
        %p445 = pneg %p64
        %s446 = sand.u32 %s30, 1
        %s447 = scalar_lea.sflag [#allocation10], %s446
        %s448 = sand.u32 %s84, 1
        %s449 = smul.addr %s448, 8
        %s450 = scalar_lea.vmem [#allocation9], %s449
        %p451 = pneg %p97
        %p452 = pneg %p94
        %p453 = pneg %p118
        %p454 = pneg %p115
        %p455 = pneg %p139
        %p456 = pneg %p136
        %p457 = pneg %p160
        %p458 = pneg %p157
        %p459 = pneg %p181
        %p460 = pneg %p178
        %p461 = pneg %p202
        %p462 = pneg %p199
        %p463 = pneg %p223
        %p464 = pneg %p220
        %p465 = pneg %p253
        %p466 = pneg %p250
        %s467 = sand.u32 %s240, 1
        %s468 = scalar_lea.sflag [#allocation8], %s467
        %s469 = sand.u32 %s240, 1
        %s470 = smul.addr %s469, 16
        %s471 = scalar_lea.vmem [#allocation18], %s470
        %p472 = scmp.gt.s32.totalorder %s34, 0
        %s473 = scalar_select %p472, %s35, 0
        %s474 = smul.u32 2, %s473
        %p475 = scmp.eq.s32.totalorder %s34, 0
        %s476 = scalar_select %p475, %s35, 0
        %s477 = smul.u32 2, %s476
        %p478 = scmp.eq.s32.totalorder %s34, 2
        %s479 = scalar_select %p478, %s35, 0
        %s480 = smul.u32 2, %s479
        %s482 = smul.u32 %s35, 16
        %p483 = scmp.eq.s32.totalorder %s34, 0
        // Predicated region
        $region81: #{tpu_custom_call.1} parent=51 // pred_check
          %p484 = pneg %p483
        $region82: #{tpu_custom_call.1} parent=51 // pred_check_branch
          %486 = sbr.rel (%p484) target = $region84
        $region83: #{tpu_custom_call.1} parent=51 // pred_region
          %v487 = vld [vmem:[%s408] sm:$0xf]
          %v488 = vld [vmem:[%s408 + $0x4] sm:$0xf]
          %v489 = vld [vmem:[#allocation11] sm:$0xf]
          %v490 = vld [vmem:[#allocation11 + $0x4] sm:$0xf]
          %v491 = vld [vmem:[#allocation11 + $0x8] sm:$0xf]
          %v492 = vld [vmem:[#allocation11 + $0xc] sm:$0xf]
          %v493 = vld [vmem:[#allocation11 + $0x10] sm:$0xf]
          %v494 = vld [vmem:[#allocation11 + $0x14] sm:$0xf]
          %v495 = vld [vmem:[#allocation11 + $0x18] sm:$0xf]
          %v496 = vld [vmem:[#allocation11 + $0x1c] sm:$0xf]
          %v497 = vld [vmem:[#allocation11 + $0x20] sm:$0xf]
          %v498 = vld [vmem:[#allocation11 + $0x24] sm:$0xf]
          %v499 = vld [vmem:[#allocation11 + $0x28] sm:$0xf]
          %v500 = vld [vmem:[#allocation11 + $0x2c] sm:$0xf]
          %v501 = vld [vmem:[#allocation11 + $0x30] sm:$0xf]
          %v502 = vld [vmem:[#allocation11 + $0x34] sm:$0xf]
          %v503 = vld [vmem:[#allocation11 + $0x38] sm:$0xf]
          %v504 = vld [vmem:[#allocation11 + $0x3c] sm:$0xf]
          %v507 = vunpack.c.l.b16 %v487
          %v508 = vunpack.c.l.b16 %v488
          %v509 = vpack.c.b16 %v508, %v507
          %v527 = vunpack.c.l.b16 %v489
          %v528 = vunpack.c.l.b16 %v490
          %v529 = vunpack.c.l.b16 %v491
          %v530 = vunpack.c.l.b16 %v492
          %v531 = vunpack.c.l.b16 %v493
          %v532 = vunpack.c.l.b16 %v494
          %v533 = vunpack.c.l.b16 %v495
          %v534 = vunpack.c.l.b16 %v496
          %v535 = vunpack.c.l.b16 %v497
          %v536 = vunpack.c.l.b16 %v498
          %v537 = vunpack.c.l.b16 %v499
          %v538 = vunpack.c.l.b16 %v500
          %v539 = vunpack.c.l.b16 %v501
          %v540 = vunpack.c.l.b16 %v502
          %v541 = vunpack.c.l.b16 %v503
          %v542 = vunpack.c.l.b16 %v504
          %v543 = vpack.c.b16 %v528, %v527
          %v544 = vpack.c.b16 %v530, %v529
          %v545 = vpack.c.b16 %v532, %v531
          %v546 = vpack.c.b16 %v534, %v533
          %v547 = vpack.c.b16 %v536, %v535
          %v548 = vpack.c.b16 %v538, %v537
          %v549 = vpack.c.b16 %v540, %v539
          %v550 = vpack.c.b16 %v542, %v541
          %559 = vmatpush.bf16.msra.mxu0 %v550
          %560 = vmatpush.bf16.msra.mxu0 %v549
          %561 = vmatpush.bf16.msra.mxu0 %v548
          %562 = vmatpush.bf16.msra.mxu0 %v547
          %563 = vmatpush.bf16.msra.mxu0 %v546
          %564 = vmatpush.bf16.msra.mxu0 %v545
          %565 = vmatpush.bf16.msra.mxu0 %v544
          %566 = vmatpush.bf16.msra.mxu0 %v543
          %567 = vmatmul.bf16.gmra.mxu0 %v509
          %v568 = vpop.f32.mrf.mxu0
          %v569 = vadd.f32 0.0, %v568
          %v570 = vpop.f32.mrf.mxu0
          %v571 = vadd.f32 0.0, %v570
          %572 = vdwg.mxu0
          %v573 = vpack.c.bf16 %v569, %v569
          %v574 = vpack.c.bf16 %v571, %v571
          %s575 = sshra.s32 %s482, 3
          %s576 = sand.u32 %s482, 7
          %s577 = smul.addr %s575, 4
          %s578 = scalar_lea.vmem [#allocation2], %s577
          %579 = vst [vmem:[%s578] sm:$0xf] %v573
          %580 = vst [vmem:[%s578 + $0x4] sm:$0xf] %v574
        $region84: #{tpu_custom_call.1} parent=51 // pred_fallthru
          _
        %p581 = scmp.eq.s32.totalorder %s34, 1
        %p582 = scmp.eq.s32.totalorder %s35, 0
        %p583 = pnand %p581, %p582
        %p584 = pneg %p583
        // Predicated region
        $region85: #{tpu_custom_call.1} parent=51 // pred_check
          _
        $region86: #{tpu_custom_call.1} parent=51 // pred_check_branch
          %586 = sbr.rel (%p583) target = $region88
        $region87: #{tpu_custom_call.1} parent=51 // pred_region
          %v587 = vld [vmem:[#allocation12] sm:$0xf]
          %v588 = vld [vmem:[#allocation2] sm:$0xf]
          %v589 = vld [vmem:[#allocation2 + $0x4] sm:$0xf]
          %v592 = vunpack.c.l.b16 %v588
          %v593 = vunpack.c.l.b16 %v589
          %v594 = vpack.c.b16 %v593, %v592
          %596 = vmatpush.bf16.xpose.msra.mxu0 0
          %597 = vmatpush.bf16.xpose.msra.mxu0 0
          %598 = vmatpush.bf16.xpose.msra.mxu0 0
          %599 = vmatpush.bf16.xpose.msra.mxu0 0
          %600 = vmatpush.bf16.xpose.msra.mxu0 0
          %601 = vmatpush.bf16.xpose.msra.mxu0 0
          %602 = vmatpush.bf16.xpose.msra.mxu0 0
          %603 = vmatpush.bf16.xpose.msra.mxu0 %v594
          %604 = vmatmul.bf16.gmra.mxu0 %v587
          %v605 = vpop.f32.mrf.mxu0
          %v606 = vadd.f32 0.0, %v605
          %v607 = vpop.f32.mrf.mxu0
          %608 = vdwg.mxu0
          %vm609 = vcmask 130048
          %610 = vst.msk [vmem:[#allocation3] sm:$0xff] %vm609, %v606
        $region88: #{tpu_custom_call.1} parent=51 // pred_fallthru
          _
        // Predicated region
        $region89: #{tpu_custom_call.1} parent=51 // pred_check
          %p611 = pneg %p581
        $region90: #{tpu_custom_call.1} parent=51 // pred_check_branch
          %613 = sbr.rel (%p611) target = $region92
        $region91: #{tpu_custom_call.1} parent=51 // pred_region
          %v614 = vld [vmem:[%s398] sm:$0xf]
          %v615 = vld [vmem:[%s398 + $0x4] sm:$0xf]
          %v616 = vlaneseq
          %v617 = vand.u32 %v616, 127
          %v618 = vlaneseq
          %v619 = vshrl.u32 %v618, 7
          %v620 = vadd.s32 %v619, 8
          %v621 = vstv %s482
          %v622 = vadd.s32 %v619, %v621
          %v623 = vadd.s32 %v620, %v621
          %v624 = vunpack.c.l.bf16 %v614
          %v625 = vunpack.c.l.bf16 %v615
          %vm626 = vcmp.ne.f32.partialorder %v624, 0.0
          %vm627 = vcmp.ne.f32.partialorder %v625, 0.0
          %vm628 = vcmp.eq.s32.totalorder %v617, %v622
          %vm629 = vcmp.eq.s32.totalorder %v617, %v623
          %vm630 = vmor %vm626, %vm628
          %vm631 = vmor %vm627, %vm629
          %v632 = vld [vmem:[#allocation2] sm:$0xf]
          %v633 = vld [vmem:[#allocation2 + $0x4] sm:$0xf]
          %s634 = sshra.s32 %s482, 3
          %s635 = sand.u32 %s482, 7
          %s636 = smul.addr %s634, 4
          %s637 = scalar_lea.vmem [#allocation2], %s636
          %v638 = vld [vmem:[%s637] sm:$0xf]
          %v639 = vld [vmem:[%s637 + $0x4] sm:$0xf]
          %v640 = vld [vmem:[#allocation14] sm:$0xf]
          %v643 = vunpack.c.l.b16 %v638
          %v644 = vunpack.c.l.b16 %v639
          %v645 = vpack.c.b16 %v644, %v643
          %647 = vmatpush.bf16.xpose.msra.mxu0 0
          %648 = vmatpush.bf16.xpose.msra.mxu0 0
          %649 = vmatpush.bf16.xpose.msra.mxu0 0
          %650 = vmatpush.bf16.xpose.msra.mxu0 0
          %651 = vmatpush.bf16.xpose.msra.mxu0 0
          %652 = vmatpush.bf16.xpose.msra.mxu0 0
          %653 = vmatpush.bf16.xpose.msra.mxu0 0
          %654 = vmatpush.bf16.xpose.msra.mxu0 %v640
          %655 = vmatmul.bf16.gmra.mxu0 %v645
          %v656 = vpop.f32.mrf.mxu0
          %v657 = vadd.f32 0.0, %v656
          %v658 = vpop.f32.mrf.mxu0
          %v659 = vadd.f32 0.0, %v658
          %660 = vdwg.mxu0
          %v661 = vld [vmem:[#allocation3] sm:$0x1]
          %663 = vset.pattern.permute.xlu0 0
          %664 = vperm.xlu0 %663, %v657
          %v665 = vpop.permute.xlu0 %664
          %668 = vset.pattern.permute.xlu0 0
          %669 = vperm.xlu0 %668, %v659
          %v670 = vpop.permute.xlu0 %669
          %v672 = vperm.slane %v661, 0
          %v673 = vadd.f32 %v665, %v672
          %v674 = vadd.f32 %v670, %v672
          %vm675 = vcmp.ge.f32.partialorder %v673, 0.0
          %vm676 = vcmp.ge.f32.partialorder %v674, 0.0
          %v677 = vmul.f32 %v673, 0.2
          %v678 = vmul.f32 %v674, 0.2
          %v679 = vsel %vm675, %v673, %v677
          %v680 = vsel %vm676, %v674, %v678
          %v681 = vsel %vm630, %v679, -1e+30
          %v682 = vsel %vm631, %v680, -1e+30
          %vm683 = vcmask 130048
          %v684 = vsel %vm683, %v681, -inf
          %685 = vmax.xlane.f32.xlu0 %v684
          %v686 = vpop.xlane.xlu0 %685
          %v687 = vsel %vm683, %v682, -inf
          %688 = vmax.xlane.f32.xlu0 %v687
          %v689 = vpop.xlane.xlu0 %688
          %v690 = vsub.f32 %v681, %v686
          %v691 = vsub.f32 %v682, %v689
          %v692 = vmul.f32 %v690, 1.442695
          %v693 = vpow.pop %v692
          %v694 = vmul.f32 %v691, 1.442695
          %v695 = vpow.pop %v694
          %v696 = vsel %vm683, %v693, 0.0
          %697 = vadd.xlane.f32.xlu0 %v696
          %v698 = vpop.xlane.xlu0 %697
          %v699 = vsel %vm683, %v695, 0.0
          %700 = vadd.xlane.f32.xlu0 %v699
          %v701 = vpop.xlane.xlu0 %700
          %v702 = vrcp.pop %v698
          %v703 = vrcp.pop %v701
          %v704 = vpack.c.bf16 %v695, %v693
          %v707 = vunpack.c.l.b16 %v632
          %v708 = vunpack.c.l.b16 %v633
          %v709 = vpack.c.b16 %v708, %v707
          %v712 = vsel %vm683, %v704, 0
          %714 = vmatpush.bf16.msra.mxu0 0
          %715 = vmatpush.bf16.msra.mxu0 0
          %716 = vmatpush.bf16.msra.mxu0 0
          %717 = vmatpush.bf16.msra.mxu0 0
          %718 = vmatpush.bf16.msra.mxu0 0
          %719 = vmatpush.bf16.msra.mxu0 0
          %720 = vmatpush.bf16.msra.mxu0 0
          %721 = vmatpush.bf16.msra.mxu0 %v709
          %722 = vmatmul.bf16.gmra.mxu0 %v712
          %v723 = vpop.f32.mrf.mxu0
          %v724 = vadd.f32 0.0, %v723
          %v725 = vpop.f32.mrf.mxu0
          %v726 = vadd.f32 0.0, %v725
          %727 = vdwg.mxu0
          %vm728 = vcmp.ge.s32.totalorder %v617, 0
          %vm729 = vcmp.lt.s32.totalorder %v617, 32
          %vm730 = vmand %vm728, %vm729
          %v731 = vsel %vm730, 1.0, 0.0
          %v732 = vmul.f32 %v702, %v731
          %v733 = vmul.f32 %v703, %v731
          %v734 = vmul.f32 %v724, %v732
          %v735 = vmul.f32 %v726, %v733
          %v736 = vadd.f32 %v734, 0.0
          %v737 = vadd.f32 %v735, 0.0
          %v738 = vld [vmem:[#allocation3 + $0x1] sm:$0x1]
          %739 = vset.pattern.permute.xlu0 1
          %740 = vperm.xlu0 %739, %v657
          %v741 = vpop.permute.xlu0 %740
          %743 = vset.pattern.permute.xlu0 1
          %744 = vperm.xlu0 %743, %v659
          %v745 = vpop.permute.xlu0 %744
          %v747 = vperm.slane %v738, 0
          %v748 = vadd.f32 %v741, %v747
          %v749 = vadd.f32 %v745, %v747
          %vm750 = vcmp.ge.f32.partialorder %v748, 0.0
          %vm751 = vcmp.ge.f32.partialorder %v749, 0.0
          %v752 = vmul.f32 %v748, 0.2
          %v753 = vmul.f32 %v749, 0.2
          %v754 = vsel %vm750, %v748, %v752
          %v755 = vsel %vm751, %v749, %v753
          %v756 = vsel %vm630, %v754, -1e+30
          %v757 = vsel %vm631, %v755, -1e+30
          %v758 = vsel %vm683, %v756, -inf
          %759 = vmax.xlane.f32.xlu0 %v758
          %v760 = vpop.xlane.xlu0 %759
          %v761 = vsel %vm683, %v757, -inf
          %762 = vmax.xlane.f32.xlu0 %v761
          %v763 = vpop.xlane.xlu0 %762
          %v764 = vsub.f32 %v756, %v760
          %v765 = vsub.f32 %v757, %v763
          %v766 = vmul.f32 %v764, 1.442695
          %v767 = vpow.pop %v766
          %v768 = vmul.f32 %v765, 1.442695
          %v769 = vpow.pop %v768
          %v770 = vsel %vm683, %v767, 0.0
          %771 = vadd.xlane.f32.xlu0 %v770
          %v772 = vpop.xlane.xlu0 %771
          %v773 = vsel %vm683, %v769, 0.0
          %774 = vadd.xlane.f32.xlu0 %v773
          %v775 = vpop.xlane.xlu0 %774
          %v776 = vrcp.pop %v772
          %v777 = vrcp.pop %v775
          %v778 = vpack.c.bf16 %v769, %v767
          %v780 = vsel %vm683, %v778, 0
          %782 = vmatpush.bf16.msra.mxu0 0
          %783 = vmatpush.bf16.msra.mxu0 0
          %784 = vmatpush.bf16.msra.mxu0 0
          %785 = vmatpush.bf16.msra.mxu0 0
          %786 = vmatpush.bf16.msra.mxu0 0
          %787 = vmatpush.bf16.msra.mxu0 0
          %788 = vmatpush.bf16.msra.mxu0 0
          %789 = vmatpush.bf16.msra.mxu0 %v709
          %790 = vmatmul.bf16.gmra.mxu0 %v780
          %v791 = vpop.f32.mrf.mxu0
          %v792 = vadd.f32 0.0, %v791
          %v793 = vpop.f32.mrf.mxu0
          %v794 = vadd.f32 0.0, %v793
          %795 = vdwg.mxu0
          %vm796 = vcmp.ge.s32.totalorder %v617, 32
          %vm797 = vcmp.lt.s32.totalorder %v617, 64
          %vm798 = vmand %vm796, %vm797
          %v799 = vsel %vm798, 1.0, 0.0
          %v800 = vmul.f32 %v776, %v799
          %v801 = vmul.f32 %v777, %v799
          %v802 = vmul.f32 %v792, %v800
          %v803 = vmul.f32 %v794, %v801
          %v804 = vadd.f32 %v736, %v802
          %v805 = vadd.f32 %v737, %v803
          %v806 = vmax.f32 %v804, 0.0
          %v807 = vmax.f32 %v805, 0.0
          %v808 = vpack.c.bf16 %v807, %v806
          %v809 = vld [vmem:[#allocation15] sm:$0xf]
          %v810 = vld [vmem:[#allocation15 + $0x4] sm:$0xf]
          %v811 = vld [vmem:[#allocation15 + $0x8] sm:$0xf]
          %v812 = vld [vmem:[#allocation15 + $0xc] sm:$0xf]
          %v813 = vld [vmem:[#allocation15 + $0x10] sm:$0xf]
          %v814 = vld [vmem:[#allocation15 + $0x14] sm:$0xf]
          %v815 = vld [vmem:[#allocation15 + $0x18] sm:$0xf]
          %v816 = vld [vmem:[#allocation15 + $0x1c] sm:$0xf]
          %v817 = vld [vmem:[#allocation15 + $0x20] sm:$0xf]
          %v818 = vld [vmem:[#allocation15 + $0x24] sm:$0xf]
          %v819 = vld [vmem:[#allocation15 + $0x28] sm:$0xf]
          %v820 = vld [vmem:[#allocation15 + $0x2c] sm:$0xf]
          %v821 = vld [vmem:[#allocation15 + $0x30] sm:$0xf]
          %v822 = vld [vmem:[#allocation15 + $0x34] sm:$0xf]
          %v823 = vld [vmem:[#allocation15 + $0x38] sm:$0xf]
          %v824 = vld [vmem:[#allocation15 + $0x3c] sm:$0xf]
          %v841 = vunpack.c.l.b16 %v809
          %v842 = vunpack.c.l.b16 %v810
          %v843 = vunpack.c.l.b16 %v811
          %v844 = vunpack.c.l.b16 %v812
          %v845 = vunpack.c.l.b16 %v813
          %v846 = vunpack.c.l.b16 %v814
          %v847 = vunpack.c.l.b16 %v815
          %v848 = vunpack.c.l.b16 %v816
          %v849 = vunpack.c.l.b16 %v817
          %v850 = vunpack.c.l.b16 %v818
          %v851 = vunpack.c.l.b16 %v819
          %v852 = vunpack.c.l.b16 %v820
          %v853 = vunpack.c.l.b16 %v821
          %v854 = vunpack.c.l.b16 %v822
          %v855 = vunpack.c.l.b16 %v823
          %v856 = vunpack.c.l.b16 %v824
          %v857 = vpack.c.b16 %v842, %v841
          %v858 = vpack.c.b16 %v844, %v843
          %v859 = vpack.c.b16 %v846, %v845
          %v860 = vpack.c.b16 %v848, %v847
          %v861 = vpack.c.b16 %v850, %v849
          %v862 = vpack.c.b16 %v852, %v851
          %v863 = vpack.c.b16 %v854, %v853
          %v864 = vpack.c.b16 %v856, %v855
          %873 = vmatpush.bf16.msra.mxu0 %v864
          %874 = vmatpush.bf16.msra.mxu0 %v863
          %875 = vmatpush.bf16.msra.mxu0 %v862
          %876 = vmatpush.bf16.msra.mxu0 %v861
          %877 = vmatpush.bf16.msra.mxu0 %v860
          %878 = vmatpush.bf16.msra.mxu0 %v859
          %879 = vmatpush.bf16.msra.mxu0 %v858
          %880 = vmatpush.bf16.msra.mxu0 %v857
          %881 = vmatmul.bf16.gmra.mxu0 %v808
          %v882 = vpop.f32.mrf.mxu0
          %v883 = vadd.f32 0.0, %v882
          %v884 = vpop.f32.mrf.mxu0
          %v885 = vadd.f32 0.0, %v884
          %886 = vdwg.mxu0
          %v887 = vpack.c.bf16 %v883, %v883
          %v888 = vpack.c.bf16 %v885, %v885
          %s889 = smul.addr %s634, 4
          %s890 = scalar_lea.vmem [#allocation4], %s889
          %891 = vst [vmem:[%s890] sm:$0xf] %v887
          %892 = vst [vmem:[%s890 + $0x4] sm:$0xf] %v888
        $region92: #{tpu_custom_call.1} parent=51 // pred_fallthru
          _
        %p893 = scmp.eq.s32.totalorder %s34, 2
        %p894 = pnand %p893, %p582
        %p895 = pneg %p894
        // Predicated region
        $region93: #{tpu_custom_call.1} parent=51 // pred_check
          _
        $region94: #{tpu_custom_call.1} parent=51 // pred_check_branch
          %897 = sbr.rel (%p894) target = $region96
        $region95: #{tpu_custom_call.1} parent=51 // pred_region
          %v898 = vld [vmem:[%s6] sm:$0xf]
          %v899 = vld [vmem:[#allocation4] sm:$0xf]
          %v900 = vld [vmem:[#allocation4 + $0x4] sm:$0xf]
          %v903 = vunpack.c.l.b16 %v899
          %v904 = vunpack.c.l.b16 %v900
          %v905 = vpack.c.b16 %v904, %v903
          %907 = vmatpush.bf16.xpose.msra.mxu0 0
          %908 = vmatpush.bf16.xpose.msra.mxu0 0
          %909 = vmatpush.bf16.xpose.msra.mxu0 0
          %910 = vmatpush.bf16.xpose.msra.mxu0 0
          %911 = vmatpush.bf16.xpose.msra.mxu0 0
          %912 = vmatpush.bf16.xpose.msra.mxu0 0
          %913 = vmatpush.bf16.xpose.msra.mxu0 0
          %914 = vmatpush.bf16.xpose.msra.mxu0 %v905
          %915 = vmatmul.bf16.gmra.mxu0 %v898
          %v916 = vpop.f32.mrf.mxu0
          %v917 = vadd.f32 0.0, %v916
          %v918 = vpop.f32.mrf.mxu0
          %919 = vdwg.mxu0
          %vm920 = vcmask 130048
          %921 = vst.msk [vmem:[#allocation5] sm:$0xff] %vm920, %v917
        $region96: #{tpu_custom_call.1} parent=51 // pred_fallthru
          _
        // Predicated region
        $region97: #{tpu_custom_call.1} parent=51 // pred_check
          %p922 = pneg %p893
        $region98: #{tpu_custom_call.1} parent=51 // pred_check_branch
          %924 = sbr.rel (%p922) target = $region100
        $region99: #{tpu_custom_call.1} parent=51 // pred_region
          %v925 = vld [vmem:[%s398] sm:$0xf]
          %v926 = vld [vmem:[%s398 + $0x4] sm:$0xf]
          %v927 = vlaneseq
          %v928 = vand.u32 %v927, 127
          %v929 = vlaneseq
          %v930 = vshrl.u32 %v929, 7
          %v931 = vadd.s32 %v930, 8
          %v932 = vstv %s482
          %v933 = vadd.s32 %v930, %v932
          %v934 = vadd.s32 %v931, %v932
          %v935 = vunpack.c.l.bf16 %v925
          %v936 = vunpack.c.l.bf16 %v926
          %vm937 = vcmp.ne.f32.partialorder %v935, 0.0
          %vm938 = vcmp.ne.f32.partialorder %v936, 0.0
          %vm939 = vcmp.eq.s32.totalorder %v928, %v933
          %vm940 = vcmp.eq.s32.totalorder %v928, %v934
          %vm941 = vmor %vm937, %vm939
          %vm942 = vmor %vm938, %vm940
          %v943 = vld [vmem:[#allocation4] sm:$0xf]
          %v944 = vld [vmem:[#allocation4 + $0x4] sm:$0xf]
          %s945 = sshra.s32 %s482, 3
          %s946 = sand.u32 %s482, 7
          %s947 = smul.addr %s945, 4
          %s948 = scalar_lea.vmem [#allocation4], %s947
          %v949 = vld [vmem:[%s948] sm:$0xf]
          %v950 = vld [vmem:[%s948 + $0x4] sm:$0xf]
          %v951 = vld [vmem:[#allocation17] sm:$0xf]
          %v954 = vunpack.c.l.b16 %v949
          %v955 = vunpack.c.l.b16 %v950
          %v956 = vpack.c.b16 %v955, %v954
          %958 = vmatpush.bf16.xpose.msra.mxu0 0
          %959 = vmatpush.bf16.xpose.msra.mxu0 0
          %960 = vmatpush.bf16.xpose.msra.mxu0 0
          %961 = vmatpush.bf16.xpose.msra.mxu0 0
          %962 = vmatpush.bf16.xpose.msra.mxu0 0
          %963 = vmatpush.bf16.xpose.msra.mxu0 0
          %964 = vmatpush.bf16.xpose.msra.mxu0 0
          %965 = vmatpush.bf16.xpose.msra.mxu0 %v951
          %966 = vmatmul.bf16.gmra.mxu0 %v956
          %v967 = vpop.f32.mrf.mxu0
          %v968 = vadd.f32 0.0, %v967
          %v969 = vpop.f32.mrf.mxu0
          %v970 = vadd.f32 0.0, %v969
          %971 = vdwg.mxu0
          %v972 = vld [vmem:[#allocation5] sm:$0x1]
          %974 = vset.pattern.permute.xlu0 0
          %975 = vperm.xlu0 %974, %v968
          %v976 = vpop.permute.xlu0 %975
          %979 = vset.pattern.permute.xlu0 0
          %980 = vperm.xlu0 %979, %v970
          %v981 = vpop.permute.xlu0 %980
          %v983 = vperm.slane %v972, 0
          %v984 = vadd.f32 %v976, %v983
          %v985 = vadd.f32 %v981, %v983
          %vm986 = vcmp.ge.f32.partialorder %v984, 0.0
          %vm987 = vcmp.ge.f32.partialorder %v985, 0.0
          %v988 = vmul.f32 %v984, 0.2
          %v989 = vmul.f32 %v985, 0.2
          %v990 = vsel %vm986, %v984, %v988
          %v991 = vsel %vm987, %v985, %v989
          %v992 = vsel %vm941, %v990, -1e+30
          %v993 = vsel %vm942, %v991, -1e+30
          %vm994 = vcmask 130048
          %v995 = vsel %vm994, %v992, -inf
          %996 = vmax.xlane.f32.xlu0 %v995
          %v997 = vpop.xlane.xlu0 %996
          %v998 = vsel %vm994, %v993, -inf
          %999 = vmax.xlane.f32.xlu0 %v998
          %v1000 = vpop.xlane.xlu0 %999
          %v1001 = vsub.f32 %v992, %v997
          %v1002 = vsub.f32 %v993, %v1000
          %v1003 = vmul.f32 %v1001, 1.442695
          %v1004 = vpow.pop %v1003
          %v1005 = vmul.f32 %v1002, 1.442695
          %v1006 = vpow.pop %v1005
          %v1007 = vsel %vm994, %v1004, 0.0
          %1008 = vadd.xlane.f32.xlu0 %v1007
          %v1009 = vpop.xlane.xlu0 %1008
          %v1010 = vsel %vm994, %v1006, 0.0
          %1011 = vadd.xlane.f32.xlu0 %v1010
          %v1012 = vpop.xlane.xlu0 %1011
          %v1013 = vrcp.pop %v1009
          %v1014 = vrcp.pop %v1012
          %v1015 = vpack.c.bf16 %v1006, %v1004
          %v1018 = vunpack.c.l.b16 %v943
          %v1019 = vunpack.c.l.b16 %v944
          %v1020 = vpack.c.b16 %v1019, %v1018
          %v1023 = vsel %vm994, %v1015, 0
          %1025 = vmatpush.bf16.msra.mxu0 0
          %1026 = vmatpush.bf16.msra.mxu0 0
          %1027 = vmatpush.bf16.msra.mxu0 0
          %1028 = vmatpush.bf16.msra.mxu0 0
          %1029 = vmatpush.bf16.msra.mxu0 0
          %1030 = vmatpush.bf16.msra.mxu0 0
          %1031 = vmatpush.bf16.msra.mxu0 0
          %1032 = vmatpush.bf16.msra.mxu0 %v1020
          %1033 = vmatmul.bf16.gmra.mxu0 %v1023
          %v1034 = vpop.f32.mrf.mxu0
          %v1035 = vadd.f32 0.0, %v1034
          %v1036 = vpop.f32.mrf.mxu0
          %v1037 = vadd.f32 0.0, %v1036
          %1038 = vdwg.mxu0
          %vm1039 = vcmp.ge.s32.totalorder %v928, 0
          %vm1040 = vcmp.lt.s32.totalorder %v928, 4
          %vm1041 = vmand %vm1039, %vm1040
          %v1042 = vsel %vm1041, 1.0, 0.0
          %v1043 = vmul.f32 %v1013, %v1042
          %v1044 = vmul.f32 %v1014, %v1042
          %v1045 = vmul.f32 %v1035, %v1043
          %v1046 = vmul.f32 %v1037, %v1044
          %v1047 = vadd.f32 %v1045, 0.0
          %v1048 = vadd.f32 %v1046, 0.0
          %v1049 = vld [vmem:[#allocation5 + $0x1] sm:$0x1]
          %1050 = vset.pattern.permute.xlu0 1
          %1051 = vperm.xlu0 %1050, %v968
          %v1052 = vpop.permute.xlu0 %1051
          %1054 = vset.pattern.permute.xlu0 1
          %1055 = vperm.xlu0 %1054, %v970
          %v1056 = vpop.permute.xlu0 %1055
          %v1058 = vperm.slane %v1049, 0
          %v1059 = vadd.f32 %v1052, %v1058
          %v1060 = vadd.f32 %v1056, %v1058
          %vm1061 = vcmp.ge.f32.partialorder %v1059, 0.0
          %vm1062 = vcmp.ge.f32.partialorder %v1060, 0.0
          %v1063 = vmul.f32 %v1059, 0.2
          %v1064 = vmul.f32 %v1060, 0.2
          %v1065 = vsel %vm1061, %v1059, %v1063
          %v1066 = vsel %vm1062, %v1060, %v1064
          %v1067 = vsel %vm941, %v1065, -1e+30
          %v1068 = vsel %vm942, %v1066, -1e+30
          %v1069 = vsel %vm994, %v1067, -inf
          %1070 = vmax.xlane.f32.xlu0 %v1069
          %v1071 = vpop.xlane.xlu0 %1070
          %v1072 = vsel %vm994, %v1068, -inf
          %1073 = vmax.xlane.f32.xlu0 %v1072
          %v1074 = vpop.xlane.xlu0 %1073
          %v1075 = vsub.f32 %v1067, %v1071
          %v1076 = vsub.f32 %v1068, %v1074
          %v1077 = vmul.f32 %v1075, 1.442695
          %v1078 = vpow.pop %v1077
          %v1079 = vmul.f32 %v1076, 1.442695
          %v1080 = vpow.pop %v1079
          %v1081 = vsel %vm994, %v1078, 0.0
          %1082 = vadd.xlane.f32.xlu0 %v1081
          %v1083 = vpop.xlane.xlu0 %1082
          %v1084 = vsel %vm994, %v1080, 0.0
          %1085 = vadd.xlane.f32.xlu0 %v1084
          %v1086 = vpop.xlane.xlu0 %1085
          %v1087 = vrcp.pop %v1083
          %v1088 = vrcp.pop %v1086
          %v1089 = vpack.c.bf16 %v1080, %v1078
          %v1091 = vsel %vm994, %v1089, 0
          %1093 = vmatpush.bf16.msra.mxu0 0
          %1094 = vmatpush.bf16.msra.mxu0 0
          %1095 = vmatpush.bf16.msra.mxu0 0
          %1096 = vmatpush.bf16.msra.mxu0 0
          %1097 = vmatpush.bf16.msra.mxu0 0
          %1098 = vmatpush.bf16.msra.mxu0 0
          %1099 = vmatpush.bf16.msra.mxu0 0
          %1100 = vmatpush.bf16.msra.mxu0 %v1020
          %1101 = vmatmul.bf16.gmra.mxu0 %v1091
          %v1102 = vpop.f32.mrf.mxu0
          %v1103 = vadd.f32 0.0, %v1102
          %v1104 = vpop.f32.mrf.mxu0
          %v1105 = vadd.f32 0.0, %v1104
          %1106 = vdwg.mxu0
          %vm1107 = vcmp.ge.s32.totalorder %v928, 4
          %vm1108 = vcmp.lt.s32.totalorder %v928, 8
          %vm1109 = vmand %vm1107, %vm1108
          %v1110 = vsel %vm1109, 1.0, 0.0
          %v1111 = vmul.f32 %v1087, %v1110
          %v1112 = vmul.f32 %v1088, %v1110
          %v1113 = vmul.f32 %v1103, %v1111
          %v1114 = vmul.f32 %v1105, %v1112
          %v1115 = vadd.f32 %v1047, %v1113
          %v1116 = vadd.f32 %v1048, %v1114
          %1117 = vst [vmem:[%s471] sm:$0xff] %v1115
          %1118 = vst [vmem:[%s471 + $0x8] sm:$0xff] %v1116
        $region100: #{tpu_custom_call.1} parent=51 // pred_fallthru
          _
        %s1119 = sand.u32 %s240, 1
        %s1120 = scalar_lea.sflag [#allocation8], %s1119
        %s1121 = sand.u32 %s240, 1
        %s1122 = smul.addr %s1121, 16
        %s1123 = scalar_lea.vmem [#allocation18], %s1122
        // Predicated region
        $region101: #{tpu_custom_call.1} parent=51 // pred_check
          %p1124 = pneg %p250
        $region102: #{tpu_custom_call.1} parent=51 // pred_check_branch
          %1126 = sbr.rel (%p1124) target = $region104
        $region103: #{tpu_custom_call.1} parent=51 // pred_region
          %p1127 = scmp.eq.s32.totalorder %s34, 2
          %s1128 = scalar_select %p1127, %s35, 0
          %s1129 = smul.u32 2, %s1128
          %1131 = vsyncadd %s1120, 0
          %s1132 = smul.addr %s1129, 8
          %s1133 = scalar_lea.hbm %s8, %s1132
          %s1134 = sshll.u32 %s1123, 4
          %s1135 = int_to_ptr.vmem [resolvable:$true] %s1134
          %s1136 = sshll.u32 %s1133, 4
          %s1137 = int_to_ptr.hbm [resolvable:$true] %s1136
          %1142 = dma.vmem_to_hbm [thread:$0]  %s1135, 256, %s1137, %s1120, 128, 128, 8
        $region104: #{tpu_custom_call.1} parent=51 // pred_fallthru
          _
      $region52: #{tpu_custom_call.1} parent=5 // pred_fallthru
        _
      %p1143 = scmp.le.s32.totalorder 2, %s25
      // Predicated region
      $region105: #{tpu_custom_call.1} parent=5 // pred_check
        %p1144 = pneg %p1143
      $region106: #{tpu_custom_call.1} parent=5 // pred_check_branch
        %1146 = sbr.rel (%p1144) target = $region108
      $region107: #{tpu_custom_call.1} parent=5 // pred_region
        %s1147 = ssub.s32 %s25, 2
        // Predicated region
        $region109: #{tpu_custom_call.1} parent=107 // pred_check
          %p1148 = pneg %p256
        $region110: #{tpu_custom_call.1} parent=107 // pred_check_branch
          %1150 = sbr.rel (%p1148) target = $region112
        $region111: #{tpu_custom_call.1} parent=107 // pred_region
          %s1151 = sand.u32 %s241, 1
          %s1152 = scalar_lea.sflag [#allocation8], %s1151
          %s1153 = sand.u32 %s241, 1
          %s1154 = smul.addr %s1153, 16
          %s1155 = scalar_lea.vmem [#allocation18], %s1154
          %1157 = dma.done %s1152, 256
        $region112: #{tpu_custom_call.1} parent=107 // pred_fallthru
          _
      $region108: #{tpu_custom_call.1} parent=5 // pred_fallthru
        _
    $region6: #{tpu_custom_call.1} parent=1 // loop_footer
      %s29 = sadd.s32 1, %s25
    $region7: #{tpu_custom_call.1} parent=1 // loop_footer_branch
      %24 = sbr.rel target = $region3
    $region8: #{tpu_custom_call.1} parent=1 // loop_exit
      _
    %1158 = vsyncpa [#allocation7], 1
    %s1159 = scalar_lea.sflag [#allocation7], 1
    %1160 = vsyncpa %s1159, 1
    %1161 = vsyncpa [#allocation10], 1
    %s1162 = scalar_lea.sflag [#allocation10], 1
    %1163 = vsyncpa %s1162, 1
    %1164 = vsyncpa [#allocation13], 1
    %1165 = vsyncpa [#allocation16], 1
    %1166 = vsyncpa [#allocation8], 1
    %s1167 = scalar_lea.sflag [#allocation8], 1
    %1168 = vsyncpa %s1167, 1

</llo_original>
